<compile_context>
chip_gen: v6e
topology: v6e:2x2x1
jax: 0.10.0
libtpu: 0.0.40
codegen_flags: <defaults>
</compile_context>

<pallas_src>
import jax
import jax.numpy as jnp
from jax.experimental import pallas as pl
from jax.experimental.pallas import tpu as pltpu

HIDDEN = 256


def _dueling_q_kernel(s_ref, w1_ref, b1_ref, w2_ref, b2_ref, wq_ref, bq_ref,
                      q_ref):
    """Single invocation; every array is a full block resident in VMEM.

    Shapes:
      s_ref  : (H, B, S)     bf16   (head-major input)
      w1_ref : (H, S, 256)   bf16   b1_ref: (H, 256) f32
      w2_ref : (H, 256, 256) bf16   b2_ref: (H, 256) f32
      wq_ref : (H, 256, A)   bf16   bq_ref: (H, A)   f32  (dueling-folded head)
      q_ref  : (H, B, A)     f32    (head-major output)
    """
    n_heads = s_ref.shape[0]
    for h in range(n_heads):                       # static, unrolled head loop
        x = jnp.dot(s_ref[h], w1_ref[h], preferred_element_type=jnp.float32)
        x = jnp.maximum(x + b1_ref[pl.ds(h, 1), :], 0.0).astype(jnp.bfloat16)

        x = jnp.dot(x, w2_ref[h], preferred_element_type=jnp.float32)
        x = jnp.maximum(x + b2_ref[pl.ds(h, 1), :], 0.0).astype(jnp.bfloat16)

        # Final layer already contains V + A - mean(A) (folded at prepare time).
        q = jnp.dot(x, wq_ref[h], preferred_element_type=jnp.float32)
        q_ref[h] = q + bq_ref[pl.ds(h, 1), :]       # dense (B, A) store


def prepare_params(params):
    """One-time re-layout of module parameters (call OUTSIDE the hot path):
      - transpose weights (H, out, in) -> (H, in, out) for row-major dot
      - fold the dueling combine (V + A - mean(A)) into the final layer:
          Wq[:, j] = wv + wa_j - mean_k(wa_k);  bq_j = bv + ba_j - mean_k(ba_k)
      - cast weights to bf16 (MXU-native, halves weight DMA); keep biases f32
    """
    w1, b1, w2, b2, wv, bv, wa, ba = params
    w1_t = jnp.transpose(w1, (0, 2, 1)).astype(jnp.bfloat16)     # (H, S, 256)
    w2_t = jnp.transpose(w2, (0, 2, 1)).astype(jnp.bfloat16)     # (H, 256, 256)
    # Fold in f32, then cast.
    wq = wv + wa - jnp.mean(wa, axis=1, keepdims=True)           # (H, A, 256)
    bq = bv + ba - jnp.mean(ba, axis=1, keepdims=True)           # (H, A)
    wq_t = jnp.transpose(wq, (0, 2, 1)).astype(jnp.bfloat16)     # (H, 256, A)
    return (w1_t, b1.astype(jnp.float32), w2_t, b2.astype(jnp.float32),
            wq_t, bq.astype(jnp.float32))


@jax.jit
def multihead_dueling_q_net(s, prepared):
    """s: (batch, n_heads, s_dim) f32.  prepared: output of prepare_params().
    Returns Q: (batch, n_heads, n_actions) f32."""
    w1_t, b1, w2_t, b2, wq_t, bq = prepared
    n_heads, _, _ = w1_t.shape
    n_actions = wq_t.shape[-1]
    batch = s.shape[0]

    # Head-major, bf16 input (clean leading-axis per-head reads in-kernel).
    s_hm = jnp.transpose(s, (1, 0, 2)).astype(jnp.bfloat16)      # (H, B, S)

    vmem = pl.BlockSpec(memory_space=pltpu.MemorySpace.VMEM)     # whole array in VMEM

    q_hm = pl.pallas_call(
        _dueling_q_kernel,
        out_shape=jax.ShapeDtypeStruct((n_heads, batch, n_actions), jnp.float32),
        in_specs=[vmem] * 7,
        out_specs=vmem,
        compiler_params=pltpu.CompilerParams(
            # Working set ~0.65 MB bf16; explicit budget documents headroom and
            # is safe on every generation (incl. v7x's 64 MiB physical VMEM).
            vmem_limit_bytes=32 * 1024 * 1024),
    )(s_hm, w1_t, b1, w2_t, b2, wq_t, bq)

    return jnp.transpose(q_hm, (1, 0, 2))                        # (B, H, A)


def init_params(key, s_dim, n_actions, n_heads):
    """Deterministic synthetic init mirroring the module's parameter shapes.

    l1/l2: random normal scaled by fan-in (stand-in for weights_init_rnd).
    lV/lA: small (0.01-scaled) random weights, zero bias (stand-in for
    orthogonal_(gain=0.01) + bias.zero_()).
    # TODO(synk): exact orthogonal_ / weights_init_rnd initializers not replicated.
    """
    ks = jax.random.split(key, 6)
    w1 = jax.random.normal(ks[0], (n_heads, HIDDEN, s_dim), jnp.float32) / jnp.sqrt(s_dim)
    b1 = jax.random.normal(ks[1], (n_heads, HIDDEN), jnp.float32) * 0.01
    w2 = jax.random.normal(ks[2], (n_heads, HIDDEN, HIDDEN), jnp.float32) / jnp.sqrt(HIDDEN)
    b2 = jax.random.normal(ks[3], (n_heads, HIDDEN), jnp.float32) * 0.01
    wv = jax.random.normal(ks[4], (n_heads, 1, HIDDEN), jnp.float32) * 0.01
    bv = jnp.zeros((n_heads, 1), jnp.float32)
    wa = jax.random.normal(ks[5], (n_heads, n_actions, HIDDEN), jnp.float32) * 0.01
    ba = jnp.zeros((n_heads, n_actions), jnp.float32)
    return (w1, b1, w2, b2, wv, bv, wa, ba)


def reference_forward(s, params):
    """Pure-f32 reference matching the PyTorch module exactly."""
    w1, b1, w2, b2, wv, bv, wa, ba = params
    x = jax.nn.relu(jnp.einsum('bhk,hok->bho', s, w1) + b1[None])
    x = jax.nn.relu(jnp.einsum('bhk,hok->bho', x, w2) + b2[None])
    V = jnp.einsum('bhk,hok->bho', x, wv) + bv[None]
    A = jnp.einsum('bhk,hok->bho', x, wa) + ba[None]
    return V + A - jnp.mean(A, axis=2, keepdims=True)


def matched_reference(s, prepared):
    """Reference with the same bf16 weights/activations + folded head as the
    kernel (isolates kernel math from quantization when validating)."""
    w1_t, b1, w2_t, b2, wq_t, bq = prepared
    x = jnp.transpose(s, (1, 0, 2)).astype(jnp.bfloat16)          # (H, B, S)
    x = jnp.einsum('hbk,hko->hbo', x, w1_t,
                   preferred_element_type=jnp.float32) + b1[:, None, :]
    x = jnp.maximum(x, 0.0).astype(jnp.bfloat16)
    x = jnp.einsum('hbk,hko->hbo', x, w2_t,
                   preferred_element_type=jnp.float32) + b2[:, None, :]
    x = jnp.maximum(x, 0.0).astype(jnp.bfloat16)
    q = jnp.einsum('hbk,hko->hbo', x, wq_t,
                   preferred_element_type=jnp.float32) + bq[:, None, :]
    return jnp.transpose(q, (1, 0, 2))                            # (B, H, A)


if __name__ == "__main__":
    batch, n_heads, s_dim, n_actions = 8, 4, 32, 8
    key = jax.random.PRNGKey(0)
    k_s, k_p = jax.random.split(key)
    s = jax.random.normal(k_s, (batch, n_heads, s_dim), jnp.float32)

    params = init_params(k_p, s_dim, n_actions, n_heads)
    prepared = prepare_params(params)        # one-time layout prep (not in hot path)

    q = multihead_dueling_q_net(s, prepared)
    q = jax.block_until_ready(q)
    assert q.shape == (batch, n_heads, n_actions)

    # Tight check: kernel math vs. an identically-quantized JAX reference.
    q_matched = matched_reference(s, prepared)
    assert jnp.allclose(q, q_matched, atol=1e-3, rtol=1e-2), \
        "mismatch vs bf16-matched reference"

    # Semantic check: vs. the pure-f32 module reference (bf16 weights + the
    # dueling-mean fold introduce only small, bounded deviations).
    q_ref = reference_forward(s, params)
    assert jnp.allclose(q, q_ref, atol=2e-2, rtol=2e-2), \
        "mismatch vs f32 JAX reference"

    print("KERNEL_OK")
</pallas_src>

<mosaic_0001>
module attributes {stable_mosaic.version = 11 : i64} {
  func.func @_dueling_q_kernel(%arg0: memref<4x8x32xbf16, #tpu.memory_space<vmem>>, %arg1: memref<4x32x256xbf16, #tpu.memory_space<vmem>>, %arg2: memref<4x256xf32, #tpu.memory_space<vmem>>, %arg3: memref<4x256x256xbf16, #tpu.memory_space<vmem>>, %arg4: memref<4x256xf32, #tpu.memory_space<vmem>>, %arg5: memref<4x256x8xbf16, #tpu.memory_space<vmem>>, %arg6: memref<4x8xf32, #tpu.memory_space<vmem>>, %arg7: memref<4x8x8xf32, #tpu.memory_space<vmem>>) attributes {dimension_semantics = [], scalar_prefetch = 0 : i64, scratch_operands = 0 : i64, tpu.core_type = #tpu.core_type<tc>} {
    %c0 = arith.constant 0 : index
    %c0_0 = arith.constant 0 : index
    %c0_1 = arith.constant 0 : index
    %0 = vector.load %arg0[%c0, %c0_0, %c0_1] : memref<4x8x32xbf16, #tpu.memory_space<vmem>>, vector<1x8x32xbf16>
    %1 = vector.shape_cast %0 : vector<1x8x32xbf16> to vector<8x32xbf16>
    %c0_2 = arith.constant 0 : index
    %c0_3 = arith.constant 0 : index
    %c0_4 = arith.constant 0 : index
    %2 = vector.load %arg1[%c0_2, %c0_3, %c0_4] : memref<4x32x256xbf16, #tpu.memory_space<vmem>>, vector<1x32x256xbf16>
    %3 = vector.shape_cast %2 : vector<1x32x256xbf16> to vector<32x256xbf16>
    %cst = arith.constant dense<0.000000e+00> : vector<8x256xf32>
    %4 = tpu.matmul %1, %3, %cst {dimension_numbers = #tpu.dot_dimension_numbers<[1], [0], [0], [1], [0, 0, 1, 1], [], []>} : vector<8x32xbf16>, vector<32x256xbf16>, vector<8x256xf32> -> vector<8x256xf32>
    %c0_5 = arith.constant 0 : index
    %c0_6 = arith.constant 0 : index
    %5 = vector.load %arg2[%c0_5, %c0_6] : memref<4x256xf32, #tpu.memory_space<vmem>>, vector<1x256xf32>
    %6 = vector.broadcast %5 : vector<1x256xf32> to vector<8x256xf32>
    %7 = arith.addf %4, %6 : vector<8x256xf32>
    %cst_7 = arith.constant 0.000000e+00 : f32
    %8 = vector.broadcast %cst_7 : f32 to vector<8x256xf32>
    %9 = arith.maximumf %7, %8 : vector<8x256xf32>
    %10 = arith.truncf %9 : vector<8x256xf32> to vector<8x256xbf16>
    %c0_8 = arith.constant 0 : index
    %c0_9 = arith.constant 0 : index
    %c0_10 = arith.constant 0 : index
    %11 = vector.load %arg3[%c0_8, %c0_9, %c0_10] : memref<4x256x256xbf16, #tpu.memory_space<vmem>>, vector<1x256x256xbf16>
    %12 = vector.shape_cast %11 : vector<1x256x256xbf16> to vector<256x256xbf16>
    %cst_11 = arith.constant dense<0.000000e+00> : vector<8x256xf32>
    %13 = tpu.matmul %10, %12, %cst_11 {dimension_numbers = #tpu.dot_dimension_numbers<[1], [0], [0], [1], [0, 0, 1, 1], [], []>} : vector<8x256xbf16>, vector<256x256xbf16>, vector<8x256xf32> -> vector<8x256xf32>
    %c0_12 = arith.constant 0 : index
    %c0_13 = arith.constant 0 : index
    %14 = vector.load %arg4[%c0_12, %c0_13] : memref<4x256xf32, #tpu.memory_space<vmem>>, vector<1x256xf32>
    %15 = vector.broadcast %14 : vector<1x256xf32> to vector<8x256xf32>
    %16 = arith.addf %13, %15 : vector<8x256xf32>
    %cst_14 = arith.constant 0.000000e+00 : f32
    %17 = vector.broadcast %cst_14 : f32 to vector<8x256xf32>
    %18 = arith.maximumf %16, %17 : vector<8x256xf32>
    %19 = arith.truncf %18 : vector<8x256xf32> to vector<8x256xbf16>
    %c0_15 = arith.constant 0 : index
    %c0_16 = arith.constant 0 : index
    %c0_17 = arith.constant 0 : index
    %20 = vector.load %arg5[%c0_15, %c0_16, %c0_17] : memref<4x256x8xbf16, #tpu.memory_space<vmem>>, vector<1x256x8xbf16>
    %21 = vector.shape_cast %20 : vector<1x256x8xbf16> to vector<256x8xbf16>
    %cst_18 = arith.constant dense<0.000000e+00> : vector<8x8xf32>
    %22 = tpu.matmul %19, %21, %cst_18 {dimension_numbers = #tpu.dot_dimension_numbers<[1], [0], [0], [1], [0, 0, 1, 1], [], []>} : vector<8x256xbf16>, vector<256x8xbf16>, vector<8x8xf32> -> vector<8x8xf32>
    %c0_19 = arith.constant 0 : index
    %c0_20 = arith.constant 0 : index
    %23 = vector.load %arg6[%c0_19, %c0_20] : memref<4x8xf32, #tpu.memory_space<vmem>>, vector<1x8xf32>
    %24 = vector.broadcast %23 : vector<1x8xf32> to vector<8x8xf32>
    %25 = arith.addf %22, %24 : vector<8x8xf32>
    %c0_21 = arith.constant 0 : index
    %c0_22 = arith.constant 0 : index
    %c0_23 = arith.constant 0 : index
    %26 = vector.load %arg7[%c0_21, %c0_22, %c0_23] : memref<4x8x8xf32, #tpu.memory_space<vmem>>, vector<1x8x8xf32>
    %27 = vector.shape_cast %26 : vector<1x8x8xf32> to vector<8x8xf32>
    %28 = vector.shape_cast %25 : vector<8x8xf32> to vector<1x8x8xf32>
    tpu.vector_store %arg7[%c0_21, %c0_22, %c0_23], %28 {strides = array<i32>} : memref<4x8x8xf32, #tpu.memory_space<vmem>>, vector<1x8x8xf32>,
    %c1 = arith.constant 1 : index
    %c0_24 = arith.constant 0 : index
    %c0_25 = arith.constant 0 : index
    %29 = vector.load %arg0[%c1, %c0_24, %c0_25] : memref<4x8x32xbf16, #tpu.memory_space<vmem>>, vector<1x8x32xbf16>
    %30 = vector.shape_cast %29 : vector<1x8x32xbf16> to vector<8x32xbf16>
    %c1_26 = arith.constant 1 : index
    %c0_27 = arith.constant 0 : index
    %c0_28 = arith.constant 0 : index
    %31 = vector.load %arg1[%c1_26, %c0_27, %c0_28] : memref<4x32x256xbf16, #tpu.memory_space<vmem>>, vector<1x32x256xbf16>
    %32 = vector.shape_cast %31 : vector<1x32x256xbf16> to vector<32x256xbf16>
    %cst_29 = arith.constant dense<0.000000e+00> : vector<8x256xf32>
    %33 = tpu.matmul %30, %32, %cst_29 {dimension_numbers = #tpu.dot_dimension_numbers<[1], [0], [0], [1], [0, 0, 1, 1], [], []>} : vector<8x32xbf16>, vector<32x256xbf16>, vector<8x256xf32> -> vector<8x256xf32>
    %c1_30 = arith.constant 1 : index
    %c0_31 = arith.constant 0 : index
    %34 = vector.load %arg2[%c1_30, %c0_31] : memref<4x256xf32, #tpu.memory_space<vmem>>, vector<1x256xf32>
    %35 = vector.broadcast %34 : vector<1x256xf32> to vector<8x256xf32>
    %36 = arith.addf %33, %35 : vector<8x256xf32>
    %cst_32 = arith.constant 0.000000e+00 : f32
    %37 = vector.broadcast %cst_32 : f32 to vector<8x256xf32>
    %38 = arith.maximumf %36, %37 : vector<8x256xf32>
    %39 = arith.truncf %38 : vector<8x256xf32> to vector<8x256xbf16>
    %c1_33 = arith.constant 1 : index
    %c0_34 = arith.constant 0 : index
    %c0_35 = arith.constant 0 : index
    %40 = vector.load %arg3[%c1_33, %c0_34, %c0_35] : memref<4x256x256xbf16, #tpu.memory_space<vmem>>, vector<1x256x256xbf16>
    %41 = vector.shape_cast %40 : vector<1x256x256xbf16> to vector<256x256xbf16>
    %cst_36 = arith.constant dense<0.000000e+00> : vector<8x256xf32>
    %42 = tpu.matmul %39, %41, %cst_36 {dimension_numbers = #tpu.dot_dimension_numbers<[1], [0], [0], [1], [0, 0, 1, 1], [], []>} : vector<8x256xbf16>, vector<256x256xbf16>, vector<8x256xf32> -> vector<8x256xf32>
    %c1_37 = arith.constant 1 : index
    %c0_38 = arith.constant 0 : index
    %43 = vector.load %arg4[%c1_37, %c0_38] : memref<4x256xf32, #tpu.memory_space<vmem>>, vector<1x256xf32>
    %44 = vector.broadcast %43 : vector<1x256xf32> to vector<8x256xf32>
    %45 = arith.addf %42, %44 : vector<8x256xf32>
    %cst_39 = arith.constant 0.000000e+00 : f32
    %46 = vector.broadcast %cst_39 : f32 to vector<8x256xf32>
    %47 = arith.maximumf %45, %46 : vector<8x256xf32>
    %48 = arith.truncf %47 : vector<8x256xf32> to vector<8x256xbf16>
    %c1_40 = arith.constant 1 : index
    %c0_41 = arith.constant 0 : index
    %c0_42 = arith.constant 0 : index
    %49 = vector.load %arg5[%c1_40, %c0_41, %c0_42] : memref<4x256x8xbf16, #tpu.memory_space<vmem>>, vector<1x256x8xbf16>
    %50 = vector.shape_cast %49 : vector<1x256x8xbf16> to vector<256x8xbf16>
    %cst_43 = arith.constant dense<0.000000e+00> : vector<8x8xf32>
    %51 = tpu.matmul %48, %50, %cst_43 {dimension_numbers = #tpu.dot_dimension_numbers<[1], [0], [0], [1], [0, 0, 1, 1], [], []>} : vector<8x256xbf16>, vector<256x8xbf16>, vector<8x8xf32> -> vector<8x8xf32>
    %c1_44 = arith.constant 1 : index
    %c0_45 = arith.constant 0 : index
    %52 = vector.load %arg6[%c1_44, %c0_45] : memref<4x8xf32, #tpu.memory_space<vmem>>, vector<1x8xf32>
    %53 = vector.broadcast %52 : vector<1x8xf32> to vector<8x8xf32>
    %54 = arith.addf %51, %53 : vector<8x8xf32>
    %c1_46 = arith.constant 1 : index
    %c0_47 = arith.constant 0 : index
    %c0_48 = arith.constant 0 : index
    %55 = vector.load %arg7[%c1_46, %c0_47, %c0_48] : memref<4x8x8xf32, #tpu.memory_space<vmem>>, vector<1x8x8xf32>
    %56 = vector.shape_cast %55 : vector<1x8x8xf32> to vector<8x8xf32>
    %57 = vector.shape_cast %54 : vector<8x8xf32> to vector<1x8x8xf32>
    tpu.vector_store %arg7[%c1_46, %c0_47, %c0_48], %57 {strides = array<i32>} : memref<4x8x8xf32, #tpu.memory_space<vmem>>, vector<1x8x8xf32>,
    %c2 = arith.constant 2 : index
    %c0_49 = arith.constant 0 : index
    %c0_50 = arith.constant 0 : index
    %58 = vector.load %arg0[%c2, %c0_49, %c0_50] : memref<4x8x32xbf16, #tpu.memory_space<vmem>>, vector<1x8x32xbf16>
    %59 = vector.shape_cast %58 : vector<1x8x32xbf16> to vector<8x32xbf16>
    %c2_51 = arith.constant 2 : index
    %c0_52 = arith.constant 0 : index
    %c0_53 = arith.constant 0 : index
    %60 = vector.load %arg1[%c2_51, %c0_52, %c0_53] : memref<4x32x256xbf16, #tpu.memory_space<vmem>>, vector<1x32x256xbf16>
    %61 = vector.shape_cast %60 : vector<1x32x256xbf16> to vector<32x256xbf16>
    %cst_54 = arith.constant dense<0.000000e+00> : vector<8x256xf32>
    %62 = tpu.matmul %59, %61, %cst_54 {dimension_numbers = #tpu.dot_dimension_numbers<[1], [0], [0], [1], [0, 0, 1, 1], [], []>} : vector<8x32xbf16>, vector<32x256xbf16>, vector<8x256xf32> -> vector<8x256xf32>
    %c2_55 = arith.constant 2 : index
    %c0_56 = arith.constant 0 : index
    %63 = vector.load %arg2[%c2_55, %c0_56] : memref<4x256xf32, #tpu.memory_space<vmem>>, vector<1x256xf32>
    %64 = vector.broadcast %63 : vector<1x256xf32> to vector<8x256xf32>
    %65 = arith.addf %62, %64 : vector<8x256xf32>
    %cst_57 = arith.constant 0.000000e+00 : f32
    %66 = vector.broadcast %cst_57 : f32 to vector<8x256xf32>
    %67 = arith.maximumf %65, %66 : vector<8x256xf32>
    %68 = arith.truncf %67 : vector<8x256xf32> to vector<8x256xbf16>
    %c2_58 = arith.constant 2 : index
    %c0_59 = arith.constant 0 : index
    %c0_60 = arith.constant 0 : index
    %69 = vector.load %arg3[%c2_58, %c0_59, %c0_60] : memref<4x256x256xbf16, #tpu.memory_space<vmem>>, vector<1x256x256xbf16>
    %70 = vector.shape_cast %69 : vector<1x256x256xbf16> to vector<256x256xbf16>
    %cst_61 = arith.constant dense<0.000000e+00> : vector<8x256xf32>
    %71 = tpu.matmul %68, %70, %cst_61 {dimension_numbers = #tpu.dot_dimension_numbers<[1], [0], [0], [1], [0, 0, 1, 1], [], []>} : vector<8x256xbf16>, vector<256x256xbf16>, vector<8x256xf32> -> vector<8x256xf32>
    %c2_62 = arith.constant 2 : index
    %c0_63 = arith.constant 0 : index
    %72 = vector.load %arg4[%c2_62, %c0_63] : memref<4x256xf32, #tpu.memory_space<vmem>>, vector<1x256xf32>
    %73 = vector.broadcast %72 : vector<1x256xf32> to vector<8x256xf32>
    %74 = arith.addf %71, %73 : vector<8x256xf32>
    %cst_64 = arith.constant 0.000000e+00 : f32
    %75 = vector.broadcast %cst_64 : f32 to vector<8x256xf32>
    %76 = arith.maximumf %74, %75 : vector<8x256xf32>
    %77 = arith.truncf %76 : vector<8x256xf32> to vector<8x256xbf16>
    %c2_65 = arith.constant 2 : index
    %c0_66 = arith.constant 0 : index
    %c0_67 = arith.constant 0 : index
    %78 = vector.load %arg5[%c2_65, %c0_66, %c0_67] : memref<4x256x8xbf16, #tpu.memory_space<vmem>>, vector<1x256x8xbf16>
    %79 = vector.shape_cast %78 : vector<1x256x8xbf16> to vector<256x8xbf16>
    %cst_68 = arith.constant dense<0.000000e+00> : vector<8x8xf32>
    %80 = tpu.matmul %77, %79, %cst_68 {dimension_numbers = #tpu.dot_dimension_numbers<[1], [0], [0], [1], [0, 0, 1, 1], [], []>} : vector<8x256xbf16>, vector<256x8xbf16>, vector<8x8xf32> -> vector<8x8xf32>
    %c2_69 = arith.constant 2 : index
    %c0_70 = arith.constant 0 : index
    %81 = vector.load %arg6[%c2_69, %c0_70] : memref<4x8xf32, #tpu.memory_space<vmem>>, vector<1x8xf32>
    %82 = vector.broadcast %81 : vector<1x8xf32> to vector<8x8xf32>
    %83 = arith.addf %80, %82 : vector<8x8xf32>
    %c2_71 = arith.constant 2 : index
    %c0_72 = arith.constant 0 : index
    %c0_73 = arith.constant 0 : index
    %84 = vector.load %arg7[%c2_71, %c0_72, %c0_73] : memref<4x8x8xf32, #tpu.memory_space<vmem>>, vector<1x8x8xf32>
    %85 = vector.shape_cast %84 : vector<1x8x8xf32> to vector<8x8xf32>
    %86 = vector.shape_cast %83 : vector<8x8xf32> to vector<1x8x8xf32>
    tpu.vector_store %arg7[%c2_71, %c0_72, %c0_73], %86 {strides = array<i32>} : memref<4x8x8xf32, #tpu.memory_space<vmem>>, vector<1x8x8xf32>,
    %c3 = arith.constant 3 : index
    %c0_74 = arith.constant 0 : index
    %c0_75 = arith.constant 0 : index
    %87 = vector.load %arg0[%c3, %c0_74, %c0_75] : memref<4x8x32xbf16, #tpu.memory_space<vmem>>, vector<1x8x32xbf16>
    %88 = vector.shape_cast %87 : vector<1x8x32xbf16> to vector<8x32xbf16>
    %c3_76 = arith.constant 3 : index
    %c0_77 = arith.constant 0 : index
    %c0_78 = arith.constant 0 : index
    %89 = vector.load %arg1[%c3_76, %c0_77, %c0_78] : memref<4x32x256xbf16, #tpu.memory_space<vmem>>, vector<1x32x256xbf16>
    %90 = vector.shape_cast %89 : vector<1x32x256xbf16> to vector<32x256xbf16>
    %cst_79 = arith.constant dense<0.000000e+00> : vector<8x256xf32>
    %91 = tpu.matmul %88, %90, %cst_79 {dimension_numbers = #tpu.dot_dimension_numbers<[1], [0], [0], [1], [0, 0, 1, 1], [], []>} : vector<8x32xbf16>, vector<32x256xbf16>, vector<8x256xf32> -> vector<8x256xf32>
    %c3_80 = arith.constant 3 : index
    %c0_81 = arith.constant 0 : index
    %92 = vector.load %arg2[%c3_80, %c0_81] : memref<4x256xf32, #tpu.memory_space<vmem>>, vector<1x256xf32>
    %93 = vector.broadcast %92 : vector<1x256xf32> to vector<8x256xf32>
    %94 = arith.addf %91, %93 : vector<8x256xf32>
    %cst_82 = arith.constant 0.000000e+00 : f32
    %95 = vector.broadcast %cst_82 : f32 to vector<8x256xf32>
    %96 = arith.maximumf %94, %95 : vector<8x256xf32>
    %97 = arith.truncf %96 : vector<8x256xf32> to vector<8x256xbf16>
    %c3_83 = arith.constant 3 : index
    %c0_84 = arith.constant 0 : index
    %c0_85 = arith.constant 0 : index
    %98 = vector.load %arg3[%c3_83, %c0_84, %c0_85] : memref<4x256x256xbf16, #tpu.memory_space<vmem>>, vector<1x256x256xbf16>
    %99 = vector.shape_cast %98 : vector<1x256x256xbf16> to vector<256x256xbf16>
    %cst_86 = arith.constant dense<0.000000e+00> : vector<8x256xf32>
    %100 = tpu.matmul %97, %99, %cst_86 {dimension_numbers = #tpu.dot_dimension_numbers<[1], [0], [0], [1], [0, 0, 1, 1], [], []>} : vector<8x256xbf16>, vector<256x256xbf16>, vector<8x256xf32> -> vector<8x256xf32>
    %c3_87 = arith.constant 3 : index
    %c0_88 = arith.constant 0 : index
    %101 = vector.load %arg4[%c3_87, %c0_88] : memref<4x256xf32, #tpu.memory_space<vmem>>, vector<1x256xf32>
    %102 = vector.broadcast %101 : vector<1x256xf32> to vector<8x256xf32>
    %103 = arith.addf %100, %102 : vector<8x256xf32>
    %cst_89 = arith.constant 0.000000e+00 : f32
    %104 = vector.broadcast %cst_89 : f32 to vector<8x256xf32>
    %105 = arith.maximumf %103, %104 : vector<8x256xf32>
    %106 = arith.truncf %105 : vector<8x256xf32> to vector<8x256xbf16>
    %c3_90 = arith.constant 3 : index
    %c0_91 = arith.constant 0 : index
    %c0_92 = arith.constant 0 : index
    %107 = vector.load %arg5[%c3_90, %c0_91, %c0_92] : memref<4x256x8xbf16, #tpu.memory_space<vmem>>, vector<1x256x8xbf16>
    %108 = vector.shape_cast %107 : vector<1x256x8xbf16> to vector<256x8xbf16>
    %cst_93 = arith.constant dense<0.000000e+00> : vector<8x8xf32>
    %109 = tpu.matmul %106, %108, %cst_93 {dimension_numbers = #tpu.dot_dimension_numbers<[1], [0], [0], [1], [0, 0, 1, 1], [], []>} : vector<8x256xbf16>, vector<256x8xbf16>, vector<8x8xf32> -> vector<8x8xf32>
    %c3_94 = arith.constant 3 : index
    %c0_95 = arith.constant 0 : index
    %110 = vector.load %arg6[%c3_94, %c0_95] : memref<4x8xf32, #tpu.memory_space<vmem>>, vector<1x8xf32>
    %111 = vector.broadcast %110 : vector<1x8xf32> to vector<8x8xf32>
    %112 = arith.addf %109, %111 : vector<8x8xf32>
    %c3_96 = arith.constant 3 : index
    %c0_97 = arith.constant 0 : index
    %c0_98 = arith.constant 0 : index
    %113 = vector.load %arg7[%c3_96, %c0_97, %c0_98] : memref<4x8x8xf32, #tpu.memory_space<vmem>>, vector<1x8x8xf32>
    %114 = vector.shape_cast %113 : vector<1x8x8xf32> to vector<8x8xf32>
    %115 = vector.shape_cast %112 : vector<8x8xf32> to vector<1x8x8xf32>
    tpu.vector_store %arg7[%c3_96, %c0_97, %c0_98], %115 {strides = array<i32>} : memref<4x8x8xf32, #tpu.memory_space<vmem>>, vector<1x8x8xf32>,
    return
  }
}

</mosaic_0001>

<llo_original>
// kernel: multihead_dueling_q_net.1
$region0: #{multihead_dueling_q_net.1}
  #allocation0 [shape = 'u32[]', space=smem, size = 0x4, offset = 0x4, fixed_abs, tag = 'smem constant byte address 0x4 - core index']
  #allocation1 [shape = 'u32[144,128]{1,0:T(1,128)}', space=vmem, size = 0x12000, scoped, tag = 'internal scratch']
  %s0 = inlined_call_operand.vmem [shape: bf16[4,8,32], index: 0, kind: input, shape index: {}]
  %s1 = inlined_call_operand.vmem [shape: bf16[4,32,256], index: 1, kind: input, shape index: {}]
  %s2 = inlined_call_operand.vmem [shape: f32[4,256], index: 2, kind: input, shape index: {}]
  %s3 = inlined_call_operand.hbm [shape: bf16[4,256,256], index: 3, kind: input, shape index: {}]
  %s4 = inlined_call_operand.vmem [shape: f32[4,256], index: 4, kind: input, shape index: {}]
  %s5 = inlined_call_operand.vmem [shape: bf16[4,256,8], index: 5, kind: input, shape index: {}]
  %s6 = inlined_call_operand.vmem [shape: f32[4,8], index: 6, kind: input, shape index: {}]
  %s7 = inlined_call_operand.vmem [shape: f32[4,8,8], index: 7, kind: output, shape index: {}]
  %s8 = sld [smem:[#allocation0]]
  $region42: #{multihead_dueling_q_net.1} parent=0
    _
  %s10 = ssub.s32 1, %s8
  %s11 = scalar_select 0, %s10, %s8
  $region1: #{multihead_dueling_q_net.1} parent=0
    #allocation2 [shape = 'u8[524288]{0}', space=vmem, size = 0x80000, scoped, tag = 'input window, operand 3, single buffered']
    #allocation3 [shape = 's32[1]{0}', space=sflag, size = 0x4, scoped, tag = 'scoped memory for multihead_dueling_q_net.1']
    %12 = vsyncpa [#allocation3], 0
    // Predicated region
    $region2: #{multihead_dueling_q_net.1} parent=1 // pred_check
      _
    $region3: #{multihead_dueling_q_net.1} parent=1 // pred_check_branch
      %14 = sbr.rel (0) target = $region5
    $region4: #{multihead_dueling_q_net.1} parent=1 // pred_region
      _
    $region5: #{multihead_dueling_q_net.1} parent=1 // pred_fallthru
      _
    // Predicated region
    $region6: #{multihead_dueling_q_net.1} parent=1 // pred_check
      _
    $region7: #{multihead_dueling_q_net.1} parent=1 // pred_check_branch
      %16 = sbr.rel (0) target = $region9
    $region8: #{multihead_dueling_q_net.1} parent=1 // pred_region
      _
    $region9: #{multihead_dueling_q_net.1} parent=1 // pred_fallthru
      _
    // Predicated region
    $region10: #{multihead_dueling_q_net.1} parent=1 // pred_check
      _
    $region11: #{multihead_dueling_q_net.1} parent=1 // pred_check_branch
      %18 = sbr.rel (0) target = $region13
    $region12: #{multihead_dueling_q_net.1} parent=1 // pred_region
      _
    $region13: #{multihead_dueling_q_net.1} parent=1 // pred_fallthru
      _
    // Predicated region
    $region14: #{multihead_dueling_q_net.1} parent=1 // pred_check
      _
    $region15: #{multihead_dueling_q_net.1} parent=1 // pred_check_branch
      %20 = sbr.rel (0) target = $region17
    $region16: #{multihead_dueling_q_net.1} parent=1 // pred_region
      %s22 = ssub.s32 16384, 16384
      %23 = vsyncadd [#allocation3], %s22
      %s24 = sshll.u32 [#allocation2], 4
      %s25 = int_to_ptr.vmem [resolvable:$true] %s24
      %30 = dma.hbm_to_vmem [thread:$0]  %s3, 16384, %s25, [#allocation3], 128, 128, 8
    $region17: #{multihead_dueling_q_net.1} parent=1 // pred_fallthru
      _
    // Predicated region
    $region18: #{multihead_dueling_q_net.1} parent=1 // pred_check
      _
    $region19: #{multihead_dueling_q_net.1} parent=1 // pred_check_branch
      %32 = sbr.rel (0) target = $region21
    $region20: #{multihead_dueling_q_net.1} parent=1 // pred_region
      _
    $region21: #{multihead_dueling_q_net.1} parent=1 // pred_fallthru
      _
    // Predicated region
    $region22: #{multihead_dueling_q_net.1} parent=1 // pred_check
      _
    $region23: #{multihead_dueling_q_net.1} parent=1 // pred_check_branch
      %34 = sbr.rel (0) target = $region25
    $region24: #{multihead_dueling_q_net.1} parent=1 // pred_region
      _
    $region25: #{multihead_dueling_q_net.1} parent=1 // pred_fallthru
      _
    // Predicated region
    $region26: #{multihead_dueling_q_net.1} parent=1 // pred_check
      _
    $region27: #{multihead_dueling_q_net.1} parent=1 // pred_check_branch
      %36 = sbr.rel (0) target = $region29
    $region28: #{multihead_dueling_q_net.1} parent=1 // pred_region
      _
    $region29: #{multihead_dueling_q_net.1} parent=1 // pred_fallthru
      _
    // Predicated region
    $region30: #{multihead_dueling_q_net.1} parent=1 // pred_check
      _
    $region31: #{multihead_dueling_q_net.1} parent=1 // pred_check_branch
      %38 = sbr.rel (0) target = $region33
    $region32: #{multihead_dueling_q_net.1} parent=1 // pred_region
      %39 = dma.done [#allocation3], 16384
    $region33: #{multihead_dueling_q_net.1} parent=1 // pred_fallthru
      _
    %v41 = vld [vmem:[%s0] sm:$0xf]
    %v42 = vld [vmem:[%s1] sm:$0xff]
    %v43 = vld [vmem:[%s1 + $0x8] sm:$0xff]
    %v44 = vld [vmem:[%s1 + $0x10] sm:$0xff]
    %v45 = vld [vmem:[%s1 + $0x18] sm:$0xff]
    %v46 = vld [vmem:[%s2] ss:$4 sm:$0x3]
    %v48 = vlaneseq
    %v49 = vshrl.u32 %v48, 7
    %v50 = vsub.s32 0, %v49
    %v51 = vrot.slane %v46, %v50
    %v52 = vlaneseq
    %v53 = vshrl.u32 %v52, 7
    %v54 = vsub.s32 1, %v53
    %v55 = vrot.slane %v46, %v54
    %v62 = vunpack.c.l.b16 %v42
    %v63 = vunpack.c.h.b16 %v42
    %v64 = vunpack.c.l.b16 %v43
    %v65 = vunpack.c.h.b16 %v43
    %v66 = vunpack.c.l.b16 %v44
    %v67 = vunpack.c.h.b16 %v44
    %v68 = vunpack.c.l.b16 %v45
    %v69 = vunpack.c.h.b16 %v45
    %v70 = vpack.c.b16 %v64, %v62
    %v71 = vpack.c.b16 %v65, %v63
    %v72 = vpack.c.b16 %v68, %v66
    %v73 = vpack.c.b16 %v69, %v67
    %vm78 = vcmask 261120
    %v80 = vsel %vm78, %v41, 0
    %82 = vmatprep.subr.bf16.mxu0 0
    %83 = vmatpush1.bf16.msra.mxu0 0
    %84 = vmatprep.subr.bf16.mxu0 0
    %85 = vmatpush1.bf16.msra.mxu0 0
    %86 = vmatprep.subr.bf16.mxu0 0
    %87 = vmatpush1.bf16.msra.mxu0 0
    %88 = vmatprep.subr.bf16.mxu0 0
    %89 = vmatpush1.bf16.msra.mxu0 0
    %90 = vmatprep.subr.bf16.mxu0 0
    %91 = vmatpush1.bf16.msra.mxu0 0
    %92 = vmatprep.subr.bf16.mxu0 0
    %93 = vmatpush1.bf16.msra.mxu0 0
    %94 = vmatprep.subr.bf16.mxu0 %v73
    %95 = vmatpush1.bf16.msra.mxu0 %v72
    %96 = vmatprep.subr.bf16.mxu0 %v71
    %97 = vmatpush1.bf16.msra.mxu0 %v70
    %98 = vmatprep.subr.bf16.mxu0 0
    %99 = vmatpush2.bf16.msra.mxu0 0
    %100 = vmatprep.subr.bf16.mxu0 0
    %101 = vmatpush2.bf16.msra.mxu0 0
    %102 = vmatprep.subr.bf16.mxu0 0
    %103 = vmatpush2.bf16.msra.mxu0 0
    %104 = vmatprep.subr.bf16.mxu0 0
    %105 = vmatpush2.bf16.msra.mxu0 0
    %106 = vmatprep.subr.bf16.mxu0 0
    %107 = vmatpush2.bf16.msra.mxu0 0
    %108 = vmatprep.subr.bf16.mxu0 0
    %109 = vmatpush2.bf16.msra.mxu0 0
    %110 = vmatprep.subr.bf16.mxu0 0
    %111 = vmatpush2.bf16.msra.mxu0 0
    %112 = vmatprep.subr.bf16.mxu0 0
    %113 = vmatpush2.bf16.msra.mxu0 0
    %114 = vmatprep.mubr.bf16.mxu0 0
    %115 = vmatmul.mubr.bf16.gmra.mxu0 %v80
    %v116 = vpop.f32.mrf.mxu0
    %v117 = vadd.f32 %v51, %v116
    %v118 = vpop.f32.mrf.mxu0
    %v119 = vadd.f32 %v55, %v118
    %v120 = vpop.f32.mrf.mxu0
    %v121 = vpop.f32.mrf.mxu0
    %122 = vdwg.mxu0
    %v123 = vmax.f32 %v117, 0.0
    %v124 = vmax.f32 %v119, 0.0
    %v125 = vpack.c.bf16 %v123, %v123
    %v126 = vpack.c.bf16 %v124, %v124
    %v127 = vld [vmem:[#allocation2] sm:$0xff]
    %v128 = vld [vmem:[#allocation2 + $0x8] sm:$0xff]
    %v129 = vld [vmem:[#allocation2 + $0x10] sm:$0xff]
    %v130 = vld [vmem:[#allocation2 + $0x18] sm:$0xff]
    %v131 = vld [vmem:[#allocation2 + $0x20] sm:$0xff]
    %v132 = vld [vmem:[#allocation2 + $0x28] sm:$0xff]
    %v133 = vld [vmem:[#allocation2 + $0x30] sm:$0xff]
    %v134 = vld [vmem:[#allocation2 + $0x38] sm:$0xff]
    %v135 = vld [vmem:[#allocation2 + $0x40] sm:$0xff]
    %v136 = vld [vmem:[#allocation2 + $0x48] sm:$0xff]
    %v137 = vld [vmem:[#allocation2 + $0x50] sm:$0xff]
    %v138 = vld [vmem:[#allocation2 + $0x58] sm:$0xff]
    %v139 = vld [vmem:[#allocation2 + $0x60] sm:$0xff]
    %v140 = vld [vmem:[#allocation2 + $0x68] sm:$0xff]
    %v141 = vld [vmem:[#allocation2 + $0x70] sm:$0xff]
    %v142 = vld [vmem:[#allocation2 + $0x78] sm:$0xff]
    %v143 = vld [vmem:[#allocation2 + $0x80] sm:$0xff]
    %v144 = vld [vmem:[#allocation2 + $0x88] sm:$0xff]
    %v145 = vld [vmem:[#allocation2 + $0x90] sm:$0xff]
    %v146 = vld [vmem:[#allocation2 + $0x98] sm:$0xff]
    %v147 = vld [vmem:[#allocation2 + $0xa0] sm:$0xff]
    %v148 = vld [vmem:[#allocation2 + $0xa8] sm:$0xff]
    %v149 = vld [vmem:[#allocation2 + $0xb0] sm:$0xff]
    %v150 = vld [vmem:[#allocation2 + $0xb8] sm:$0xff]
    %v151 = vld [vmem:[#allocation2 + $0xc0] sm:$0xff]
    %v152 = vld [vmem:[#allocation2 + $0xc8] sm:$0xff]
    %v153 = vld [vmem:[#allocation2 + $0xd0] sm:$0xff]
    %v154 = vld [vmem:[#allocation2 + $0xd8] sm:$0xff]
    %v155 = vld [vmem:[#allocation2 + $0xe0] sm:$0xff]
    %v156 = vld [vmem:[#allocation2 + $0xe8] sm:$0xff]
    %v157 = vld [vmem:[#allocation2 + $0xf0] sm:$0xff]
    %v158 = vld [vmem:[#allocation2 + $0xf8] sm:$0xff]
    %v159 = vld [vmem:[%s4] ss:$4 sm:$0x3]
    %v161 = vlaneseq
    %v162 = vshrl.u32 %v161, 7
    %v163 = vsub.s32 0, %v162
    %v164 = vrot.slane %v159, %v163
    %v165 = vlaneseq
    %v166 = vshrl.u32 %v165, 7
    %v167 = vsub.s32 1, %v166
    %v168 = vrot.slane %v159, %v167
    %v203 = vunpack.c.l.b16 %v127
    %v204 = vunpack.c.h.b16 %v127
    %v205 = vunpack.c.l.b16 %v128
    %v206 = vunpack.c.h.b16 %v128
    %v207 = vunpack.c.l.b16 %v129
    %v208 = vunpack.c.h.b16 %v129
    %v209 = vunpack.c.l.b16 %v130
    %v210 = vunpack.c.h.b16 %v130
    %v211 = vunpack.c.l.b16 %v131
    %v212 = vunpack.c.h.b16 %v131
    %v213 = vunpack.c.l.b16 %v132
    %v214 = vunpack.c.h.b16 %v132
    %v215 = vunpack.c.l.b16 %v133
    %v216 = vunpack.c.h.b16 %v133
    %v217 = vunpack.c.l.b16 %v134
    %v218 = vunpack.c.h.b16 %v134
    %v219 = vunpack.c.l.b16 %v135
    %v220 = vunpack.c.h.b16 %v135
    %v221 = vunpack.c.l.b16 %v136
    %v222 = vunpack.c.h.b16 %v136
    %v223 = vunpack.c.l.b16 %v137
    %v224 = vunpack.c.h.b16 %v137
    %v225 = vunpack.c.l.b16 %v138
    %v226 = vunpack.c.h.b16 %v138
    %v227 = vunpack.c.l.b16 %v139
    %v228 = vunpack.c.h.b16 %v139
    %v229 = vunpack.c.l.b16 %v140
    %v230 = vunpack.c.h.b16 %v140
    %v231 = vunpack.c.l.b16 %v141
    %v232 = vunpack.c.h.b16 %v141
    %v233 = vunpack.c.l.b16 %v142
    %v234 = vunpack.c.h.b16 %v142
    %v235 = vunpack.c.l.b16 %v143
    %v236 = vunpack.c.h.b16 %v143
    %v237 = vunpack.c.l.b16 %v144
    %v238 = vunpack.c.h.b16 %v144
    %v239 = vunpack.c.l.b16 %v145
    %v240 = vunpack.c.h.b16 %v145
    %v241 = vunpack.c.l.b16 %v146
    %v242 = vunpack.c.h.b16 %v146
    %v243 = vunpack.c.l.b16 %v147
    %v244 = vunpack.c.h.b16 %v147
    %v245 = vunpack.c.l.b16 %v148
    %v246 = vunpack.c.h.b16 %v148
    %v247 = vunpack.c.l.b16 %v149
    %v248 = vunpack.c.h.b16 %v149
    %v249 = vunpack.c.l.b16 %v150
    %v250 = vunpack.c.h.b16 %v150
    %v251 = vunpack.c.l.b16 %v151
    %v252 = vunpack.c.h.b16 %v151
    %v253 = vunpack.c.l.b16 %v152
    %v254 = vunpack.c.h.b16 %v152
    %v255 = vunpack.c.l.b16 %v153
    %v256 = vunpack.c.h.b16 %v153
    %v257 = vunpack.c.l.b16 %v154
    %v258 = vunpack.c.h.b16 %v154
    %v259 = vunpack.c.l.b16 %v155
    %v260 = vunpack.c.h.b16 %v155
    %v261 = vunpack.c.l.b16 %v156
    %v262 = vunpack.c.h.b16 %v156
    %v263 = vunpack.c.l.b16 %v157
    %v264 = vunpack.c.h.b16 %v157
    %v265 = vunpack.c.l.b16 %v158
    %v266 = vunpack.c.h.b16 %v158
    %v267 = vpack.c.b16 %v205, %v203
    %v268 = vpack.c.b16 %v206, %v204
    %v269 = vpack.c.b16 %v209, %v207
    %v270 = vpack.c.b16 %v210, %v208
    %v271 = vpack.c.b16 %v213, %v211
    %v272 = vpack.c.b16 %v214, %v212
    %v273 = vpack.c.b16 %v217, %v215
    %v274 = vpack.c.b16 %v218, %v216
    %v275 = vpack.c.b16 %v221, %v219
    %v276 = vpack.c.b16 %v222, %v220
    %v277 = vpack.c.b16 %v225, %v223
    %v278 = vpack.c.b16 %v226, %v224
    %v279 = vpack.c.b16 %v229, %v227
    %v280 = vpack.c.b16 %v230, %v228
    %v281 = vpack.c.b16 %v233, %v231
    %v282 = vpack.c.b16 %v234, %v232
    %v283 = vpack.c.b16 %v237, %v235
    %v284 = vpack.c.b16 %v238, %v236
    %v285 = vpack.c.b16 %v241, %v239
    %v286 = vpack.c.b16 %v242, %v240
    %v287 = vpack.c.b16 %v245, %v243
    %v288 = vpack.c.b16 %v246, %v244
    %v289 = vpack.c.b16 %v249, %v247
    %v290 = vpack.c.b16 %v250, %v248
    %v291 = vpack.c.b16 %v253, %v251
    %v292 = vpack.c.b16 %v254, %v252
    %v293 = vpack.c.b16 %v257, %v255
    %v294 = vpack.c.b16 %v258, %v256
    %v295 = vpack.c.b16 %v261, %v259
    %v296 = vpack.c.b16 %v262, %v260
    %v297 = vpack.c.b16 %v265, %v263
    %v298 = vpack.c.b16 %v266, %v264
    %331 = vmatprep.subr.bf16.mxu0 %v282
    %332 = vmatpush1.bf16.msra.mxu0 %v281
    %333 = vmatprep.subr.bf16.mxu0 %v280
    %334 = vmatpush1.bf16.msra.mxu0 %v279
    %335 = vmatprep.subr.bf16.mxu0 %v278
    %336 = vmatpush1.bf16.msra.mxu0 %v277
    %337 = vmatprep.subr.bf16.mxu0 %v276
    %338 = vmatpush1.bf16.msra.mxu0 %v275
    %339 = vmatprep.subr.bf16.mxu0 %v274
    %340 = vmatpush1.bf16.msra.mxu0 %v273
    %341 = vmatprep.subr.bf16.mxu0 %v272
    %342 = vmatpush1.bf16.msra.mxu0 %v271
    %343 = vmatprep.subr.bf16.mxu0 %v270
    %344 = vmatpush1.bf16.msra.mxu0 %v269
    %345 = vmatprep.subr.bf16.mxu0 %v268
    %346 = vmatpush1.bf16.msra.mxu0 %v267
    %347 = vmatprep.subr.bf16.mxu0 %v298
    %348 = vmatpush2.bf16.msra.mxu0 %v297
    %349 = vmatprep.subr.bf16.mxu0 %v296
    %350 = vmatpush2.bf16.msra.mxu0 %v295
    %351 = vmatprep.subr.bf16.mxu0 %v294
    %352 = vmatpush2.bf16.msra.mxu0 %v293
    %353 = vmatprep.subr.bf16.mxu0 %v292
    %354 = vmatpush2.bf16.msra.mxu0 %v291
    %355 = vmatprep.subr.bf16.mxu0 %v290
    %356 = vmatpush2.bf16.msra.mxu0 %v289
    %357 = vmatprep.subr.bf16.mxu0 %v288
    %358 = vmatpush2.bf16.msra.mxu0 %v287
    %359 = vmatprep.subr.bf16.mxu0 %v286
    %360 = vmatpush2.bf16.msra.mxu0 %v285
    %361 = vmatprep.subr.bf16.mxu0 %v284
    %362 = vmatpush2.bf16.msra.mxu0 %v283
    %363 = vmatprep.mubr.bf16.mxu0 %v126
    %364 = vmatmul.mubr.bf16.gmra.mxu0 %v125
    %v365 = vpop.f32.mrf.mxu0
    %v366 = vadd.f32 %v164, %v365
    %v367 = vpop.f32.mrf.mxu0
    %v368 = vadd.f32 %v168, %v367
    %v369 = vpop.f32.mrf.mxu0
    %v370 = vpop.f32.mrf.mxu0
    %371 = vdwg.mxu0
    %v372 = vmax.f32 %v366, 0.0
    %v373 = vmax.f32 %v368, 0.0
    %v374 = vpack.c.bf16 %v372, %v372
    %v375 = vpack.c.bf16 %v373, %v373
    %v376 = vld [vmem:[%s5] sm:$0xf]
    %v377 = vld [vmem:[%s5 + $0x4] sm:$0xf]
    %v378 = vld [vmem:[%s5 + $0x8] sm:$0xf]
    %v379 = vld [vmem:[%s5 + $0xc] sm:$0xf]
    %v380 = vld [vmem:[%s5 + $0x10] sm:$0xf]
    %v381 = vld [vmem:[%s5 + $0x14] sm:$0xf]
    %v382 = vld [vmem:[%s5 + $0x18] sm:$0xf]
    %v383 = vld [vmem:[%s5 + $0x1c] sm:$0xf]
    %v384 = vld [vmem:[%s5 + $0x20] sm:$0xf]
    %v385 = vld [vmem:[%s5 + $0x24] sm:$0xf]
    %v386 = vld [vmem:[%s5 + $0x28] sm:$0xf]
    %v387 = vld [vmem:[%s5 + $0x2c] sm:$0xf]
    %v388 = vld [vmem:[%s5 + $0x30] sm:$0xf]
    %v389 = vld [vmem:[%s5 + $0x34] sm:$0xf]
    %v390 = vld [vmem:[%s5 + $0x38] sm:$0xf]
    %v391 = vld [vmem:[%s5 + $0x3c] sm:$0xf]
    %v392 = vld [vmem:[%s5 + $0x40] sm:$0xf]
    %v393 = vld [vmem:[%s5 + $0x44] sm:$0xf]
    %v394 = vld [vmem:[%s5 + $0x48] sm:$0xf]
    %v395 = vld [vmem:[%s5 + $0x4c] sm:$0xf]
    %v396 = vld [vmem:[%s5 + $0x50] sm:$0xf]
    %v397 = vld [vmem:[%s5 + $0x54] sm:$0xf]
    %v398 = vld [vmem:[%s5 + $0x58] sm:$0xf]
    %v399 = vld [vmem:[%s5 + $0x5c] sm:$0xf]
    %v400 = vld [vmem:[%s5 + $0x60] sm:$0xf]
    %v401 = vld [vmem:[%s5 + $0x64] sm:$0xf]
    %v402 = vld [vmem:[%s5 + $0x68] sm:$0xf]
    %v403 = vld [vmem:[%s5 + $0x6c] sm:$0xf]
    %v404 = vld [vmem:[%s5 + $0x70] sm:$0xf]
    %v405 = vld [vmem:[%s5 + $0x74] sm:$0xf]
    %v406 = vld [vmem:[%s5 + $0x78] sm:$0xf]
    %v407 = vld [vmem:[%s5 + $0x7c] sm:$0xf]
    %v408 = vld [vmem:[%s6] sm:$0x1]
    %v409 = vlaneseq
    %v410 = vshrl.u32 %v409, 7
    %v411 = vsub.s32 0, %v410
    %v412 = vrot.slane %v408, %v411
    %v445 = vunpack.c.l.b16 %v376
    %v446 = vunpack.c.l.b16 %v377
    %v447 = vunpack.c.l.b16 %v378
    %v448 = vunpack.c.l.b16 %v379
    %v449 = vunpack.c.l.b16 %v380
    %v450 = vunpack.c.l.b16 %v381
    %v451 = vunpack.c.l.b16 %v382
    %v452 = vunpack.c.l.b16 %v383
    %v453 = vunpack.c.l.b16 %v384
    %v454 = vunpack.c.l.b16 %v385
    %v455 = vunpack.c.l.b16 %v386
    %v456 = vunpack.c.l.b16 %v387
    %v457 = vunpack.c.l.b16 %v388
    %v458 = vunpack.c.l.b16 %v389
    %v459 = vunpack.c.l.b16 %v390
    %v460 = vunpack.c.l.b16 %v391
    %v461 = vunpack.c.l.b16 %v392
    %v462 = vunpack.c.l.b16 %v393
    %v463 = vunpack.c.l.b16 %v394
    %v464 = vunpack.c.l.b16 %v395
    %v465 = vunpack.c.l.b16 %v396
    %v466 = vunpack.c.l.b16 %v397
    %v467 = vunpack.c.l.b16 %v398
    %v468 = vunpack.c.l.b16 %v399
    %v469 = vunpack.c.l.b16 %v400
    %v470 = vunpack.c.l.b16 %v401
    %v471 = vunpack.c.l.b16 %v402
    %v472 = vunpack.c.l.b16 %v403
    %v473 = vunpack.c.l.b16 %v404
    %v474 = vunpack.c.l.b16 %v405
    %v475 = vunpack.c.l.b16 %v406
    %v476 = vunpack.c.l.b16 %v407
    %v477 = vpack.c.b16 %v446, %v445
    %v478 = vpack.c.b16 %v448, %v447
    %v479 = vpack.c.b16 %v450, %v449
    %v480 = vpack.c.b16 %v452, %v451
    %v481 = vpack.c.b16 %v454, %v453
    %v482 = vpack.c.b16 %v456, %v455
    %v483 = vpack.c.b16 %v458, %v457
    %v484 = vpack.c.b16 %v460, %v459
    %v485 = vpack.c.b16 %v462, %v461
    %v486 = vpack.c.b16 %v464, %v463
    %v487 = vpack.c.b16 %v466, %v465
    %v488 = vpack.c.b16 %v468, %v467
    %v489 = vpack.c.b16 %v470, %v469
    %v490 = vpack.c.b16 %v472, %v471
    %v491 = vpack.c.b16 %v474, %v473
    %v492 = vpack.c.b16 %v476, %v475
    %509 = vmatprep.subr.bf16.mxu0 0
    %510 = vmatpush1.bf16.msra.mxu0 %v484
    %511 = vmatprep.subr.bf16.mxu0 0
    %512 = vmatpush1.bf16.msra.mxu0 %v483
    %513 = vmatprep.subr.bf16.mxu0 0
    %514 = vmatpush1.bf16.msra.mxu0 %v482
    %515 = vmatprep.subr.bf16.mxu0 0
    %516 = vmatpush1.bf16.msra.mxu0 %v481
    %517 = vmatprep.subr.bf16.mxu0 0
    %518 = vmatpush1.bf16.msra.mxu0 %v480
    %519 = vmatprep.subr.bf16.mxu0 0
    %520 = vmatpush1.bf16.msra.mxu0 %v479
    %521 = vmatprep.subr.bf16.mxu0 0
    %522 = vmatpush1.bf16.msra.mxu0 %v478
    %523 = vmatprep.subr.bf16.mxu0 0
    %524 = vmatpush1.bf16.msra.mxu0 %v477
    %525 = vmatprep.subr.bf16.mxu0 0
    %526 = vmatpush2.bf16.msra.mxu0 %v492
    %527 = vmatprep.subr.bf16.mxu0 0
    %528 = vmatpush2.bf16.msra.mxu0 %v491
    %529 = vmatprep.subr.bf16.mxu0 0
    %530 = vmatpush2.bf16.msra.mxu0 %v490
    %531 = vmatprep.subr.bf16.mxu0 0
    %532 = vmatpush2.bf16.msra.mxu0 %v489
    %533 = vmatprep.subr.bf16.mxu0 0
    %534 = vmatpush2.bf16.msra.mxu0 %v488
    %535 = vmatprep.subr.bf16.mxu0 0
    %536 = vmatpush2.bf16.msra.mxu0 %v487
    %537 = vmatprep.subr.bf16.mxu0 0
    %538 = vmatpush2.bf16.msra.mxu0 %v486
    %539 = vmatprep.subr.bf16.mxu0 0
    %540 = vmatpush2.bf16.msra.mxu0 %v485
    %541 = vmatprep.mubr.bf16.mxu0 %v375
    %542 = vmatmul.mubr.bf16.gmra.mxu0 %v374
    %v543 = vpop.f32.mrf.mxu0
    %v544 = vadd.f32 %v412, %v543
    %v545 = vpop.f32.mrf.mxu0
    %v546 = vpop.f32.mrf.mxu0
    %v547 = vpop.f32.mrf.mxu0
    %548 = vdwg.mxu0
    %vm549 = vcmask 64512
    %550 = vst.msk [vmem:[%s7] sm:$0xff] %vm549, %v544
    %s551 = scalar_lea.vmem %s0, 4
    %v552 = vld [vmem:[%s551] sm:$0xf]
    %s553 = scalar_lea.vmem %s1, 32
    %v554 = vld [vmem:[%s553] sm:$0xff]
    %v555 = vld [vmem:[%s553 + $0x8] sm:$0xff]
    %v556 = vld [vmem:[%s553 + $0x10] sm:$0xff]
    %v557 = vld [vmem:[%s553 + $0x18] sm:$0xff]
    %s558 = scalar_lea.vmem %s2, 1
    %v559 = vld [vmem:[%s558] ss:$4 sm:$0x3]
    %v561 = vlaneseq
    %v562 = vshrl.u32 %v561, 7
    %v563 = vsub.s32 0, %v562
    %v564 = vrot.slane %v559, %v563
    %v565 = vlaneseq
    %v566 = vshrl.u32 %v565, 7
    %v567 = vsub.s32 1, %v566
    %v568 = vrot.slane %v559, %v567
    %v575 = vunpack.c.l.b16 %v554
    %v576 = vunpack.c.h.b16 %v554
    %v577 = vunpack.c.l.b16 %v555
    %v578 = vunpack.c.h.b16 %v555
    %v579 = vunpack.c.l.b16 %v556
    %v580 = vunpack.c.h.b16 %v556
    %v581 = vunpack.c.l.b16 %v557
    %v582 = vunpack.c.h.b16 %v557
    %v583 = vpack.c.b16 %v577, %v575
    %v584 = vpack.c.b16 %v578, %v576
    %v585 = vpack.c.b16 %v581, %v579
    %v586 = vpack.c.b16 %v582, %v580
    %v592 = vsel %vm78, %v552, 0
    %594 = vmatprep.subr.bf16.mxu0 0
    %595 = vmatpush1.bf16.msra.mxu0 0
    %596 = vmatprep.subr.bf16.mxu0 0
    %597 = vmatpush1.bf16.msra.mxu0 0
    %598 = vmatprep.subr.bf16.mxu0 0
    %599 = vmatpush1.bf16.msra.mxu0 0
    %600 = vmatprep.subr.bf16.mxu0 0
    %601 = vmatpush1.bf16.msra.mxu0 0
    %602 = vmatprep.subr.bf16.mxu0 0
    %603 = vmatpush1.bf16.msra.mxu0 0
    %604 = vmatprep.subr.bf16.mxu0 0
    %605 = vmatpush1.bf16.msra.mxu0 0
    %606 = vmatprep.subr.bf16.mxu0 %v586
    %607 = vmatpush1.bf16.msra.mxu0 %v585
    %608 = vmatprep.subr.bf16.mxu0 %v584
    %609 = vmatpush1.bf16.msra.mxu0 %v583
    %610 = vmatprep.subr.bf16.mxu0 0
    %611 = vmatpush2.bf16.msra.mxu0 0
    %612 = vmatprep.subr.bf16.mxu0 0
    %613 = vmatpush2.bf16.msra.mxu0 0
    %614 = vmatprep.subr.bf16.mxu0 0
    %615 = vmatpush2.bf16.msra.mxu0 0
    %616 = vmatprep.subr.bf16.mxu0 0
    %617 = vmatpush2.bf16.msra.mxu0 0
    %618 = vmatprep.subr.bf16.mxu0 0
    %619 = vmatpush2.bf16.msra.mxu0 0
    %620 = vmatprep.subr.bf16.mxu0 0
    %621 = vmatpush2.bf16.msra.mxu0 0
    %622 = vmatprep.subr.bf16.mxu0 0
    %623 = vmatpush2.bf16.msra.mxu0 0
    %624 = vmatprep.subr.bf16.mxu0 0
    %625 = vmatpush2.bf16.msra.mxu0 0
    %626 = vmatprep.mubr.bf16.mxu0 0
    %627 = vmatmul.mubr.bf16.gmra.mxu0 %v592
    %v628 = vpop.f32.mrf.mxu0
    %v629 = vadd.f32 %v564, %v628
    %v630 = vpop.f32.mrf.mxu0
    %v631 = vadd.f32 %v568, %v630
    %v632 = vpop.f32.mrf.mxu0
    %v633 = vpop.f32.mrf.mxu0
    %634 = vdwg.mxu0
    %v635 = vmax.f32 %v629, 0.0
    %v636 = vmax.f32 %v631, 0.0
    %v637 = vpack.c.bf16 %v635, %v635
    %v638 = vpack.c.bf16 %v636, %v636
    %s639 = scalar_lea.vmem [#allocation2], 256
    %v640 = vld [vmem:[%s639] sm:$0xff]
    %v641 = vld [vmem:[%s639 + $0x8] sm:$0xff]
    %v642 = vld [vmem:[%s639 + $0x10] sm:$0xff]
    %v643 = vld [vmem:[%s639 + $0x18] sm:$0xff]
    %v644 = vld [vmem:[%s639 + $0x20] sm:$0xff]
    %v645 = vld [vmem:[%s639 + $0x28] sm:$0xff]
    %v646 = vld [vmem:[%s639 + $0x30] sm:$0xff]
    %v647 = vld [vmem:[%s639 + $0x38] sm:$0xff]
    %v648 = vld [vmem:[%s639 + $0x40] sm:$0xff]
    %v649 = vld [vmem:[%s639 + $0x48] sm:$0xff]
    %v650 = vld [vmem:[%s639 + $0x50] sm:$0xff]
    %v651 = vld [vmem:[%s639 + $0x58] sm:$0xff]
    %v652 = vld [vmem:[%s639 + $0x60] sm:$0xff]
    %v653 = vld [vmem:[%s639 + $0x68] sm:$0xff]
    %v654 = vld [vmem:[%s639 + $0x70] sm:$0xff]
    %v655 = vld [vmem:[%s639 + $0x78] sm:$0xff]
    %v656 = vld [vmem:[%s639 + $0x80] sm:$0xff]
    %v657 = vld [vmem:[%s639 + $0x88] sm:$0xff]
    %v658 = vld [vmem:[%s639 + $0x90] sm:$0xff]
    %v659 = vld [vmem:[%s639 + $0x98] sm:$0xff]
    %v660 = vld [vmem:[%s639 + $0xa0] sm:$0xff]
    %v661 = vld [vmem:[%s639 + $0xa8] sm:$0xff]
    %v662 = vld [vmem:[%s639 + $0xb0] sm:$0xff]
    %v663 = vld [vmem:[%s639 + $0xb8] sm:$0xff]
    %v664 = vld [vmem:[%s639 + $0xc0] sm:$0xff]
    %v665 = vld [vmem:[%s639 + $0xc8] sm:$0xff]
    %v666 = vld [vmem:[%s639 + $0xd0] sm:$0xff]
    %v667 = vld [vmem:[%s639 + $0xd8] sm:$0xff]
    %v668 = vld [vmem:[%s639 + $0xe0] sm:$0xff]
    %v669 = vld [vmem:[%s639 + $0xe8] sm:$0xff]
    %v670 = vld [vmem:[%s639 + $0xf0] sm:$0xff]
    %v671 = vld [vmem:[%s639 + $0xf8] sm:$0xff]
    %s672 = scalar_lea.vmem %s4, 1
    %v673 = vld [vmem:[%s672] ss:$4 sm:$0x3]
    %v675 = vlaneseq
    %v676 = vshrl.u32 %v675, 7
    %v677 = vsub.s32 0, %v676
    %v678 = vrot.slane %v673, %v677
    %v679 = vlaneseq
    %v680 = vshrl.u32 %v679, 7
    %v681 = vsub.s32 1, %v680
    %v682 = vrot.slane %v673, %v681
    %v717 = vunpack.c.l.b16 %v640
    %v718 = vunpack.c.h.b16 %v640
    %v719 = vunpack.c.l.b16 %v641
    %v720 = vunpack.c.h.b16 %v641
    %v721 = vunpack.c.l.b16 %v642
    %v722 = vunpack.c.h.b16 %v642
    %v723 = vunpack.c.l.b16 %v643
    %v724 = vunpack.c.h.b16 %v643
    %v725 = vunpack.c.l.b16 %v644
    %v726 = vunpack.c.h.b16 %v644
    %v727 = vunpack.c.l.b16 %v645
    %v728 = vunpack.c.h.b16 %v645
    %v729 = vunpack.c.l.b16 %v646
    %v730 = vunpack.c.h.b16 %v646
    %v731 = vunpack.c.l.b16 %v647
    %v732 = vunpack.c.h.b16 %v647
    %v733 = vunpack.c.l.b16 %v648
    %v734 = vunpack.c.h.b16 %v648
    %v735 = vunpack.c.l.b16 %v649
    %v736 = vunpack.c.h.b16 %v649
    %v737 = vunpack.c.l.b16 %v650
    %v738 = vunpack.c.h.b16 %v650
    %v739 = vunpack.c.l.b16 %v651
    %v740 = vunpack.c.h.b16 %v651
    %v741 = vunpack.c.l.b16 %v652
    %v742 = vunpack.c.h.b16 %v652
    %v743 = vunpack.c.l.b16 %v653
    %v744 = vunpack.c.h.b16 %v653
    %v745 = vunpack.c.l.b16 %v654
    %v746 = vunpack.c.h.b16 %v654
    %v747 = vunpack.c.l.b16 %v655
    %v748 = vunpack.c.h.b16 %v655
    %v749 = vunpack.c.l.b16 %v656
    %v750 = vunpack.c.h.b16 %v656
    %v751 = vunpack.c.l.b16 %v657
    %v752 = vunpack.c.h.b16 %v657
    %v753 = vunpack.c.l.b16 %v658
    %v754 = vunpack.c.h.b16 %v658
    %v755 = vunpack.c.l.b16 %v659
    %v756 = vunpack.c.h.b16 %v659
    %v757 = vunpack.c.l.b16 %v660
    %v758 = vunpack.c.h.b16 %v660
    %v759 = vunpack.c.l.b16 %v661
    %v760 = vunpack.c.h.b16 %v661
    %v761 = vunpack.c.l.b16 %v662
    %v762 = vunpack.c.h.b16 %v662
    %v763 = vunpack.c.l.b16 %v663
    %v764 = vunpack.c.h.b16 %v663
    %v765 = vunpack.c.l.b16 %v664
    %v766 = vunpack.c.h.b16 %v664
    %v767 = vunpack.c.l.b16 %v665
    %v768 = vunpack.c.h.b16 %v665
    %v769 = vunpack.c.l.b16 %v666
    %v770 = vunpack.c.h.b16 %v666
    %v771 = vunpack.c.l.b16 %v667
    %v772 = vunpack.c.h.b16 %v667
    %v773 = vunpack.c.l.b16 %v668
    %v774 = vunpack.c.h.b16 %v668
    %v775 = vunpack.c.l.b16 %v669
    %v776 = vunpack.c.h.b16 %v669
    %v777 = vunpack.c.l.b16 %v670
    %v778 = vunpack.c.h.b16 %v670
    %v779 = vunpack.c.l.b16 %v671
    %v780 = vunpack.c.h.b16 %v671
    %v781 = vpack.c.b16 %v719, %v717
    %v782 = vpack.c.b16 %v720, %v718
    %v783 = vpack.c.b16 %v723, %v721
    %v784 = vpack.c.b16 %v724, %v722
    %v785 = vpack.c.b16 %v727, %v725
    %v786 = vpack.c.b16 %v728, %v726
    %v787 = vpack.c.b16 %v731, %v729
    %v788 = vpack.c.b16 %v732, %v730
    %v789 = vpack.c.b16 %v735, %v733
    %v790 = vpack.c.b16 %v736, %v734
    %v791 = vpack.c.b16 %v739, %v737
    %v792 = vpack.c.b16 %v740, %v738
    %v793 = vpack.c.b16 %v743, %v741
    %v794 = vpack.c.b16 %v744, %v742
    %v795 = vpack.c.b16 %v747, %v745
    %v796 = vpack.c.b16 %v748, %v746
    %v797 = vpack.c.b16 %v751, %v749
    %v798 = vpack.c.b16 %v752, %v750
    %v799 = vpack.c.b16 %v755, %v753
    %v800 = vpack.c.b16 %v756, %v754
    %v801 = vpack.c.b16 %v759, %v757
    %v802 = vpack.c.b16 %v760, %v758
    %v803 = vpack.c.b16 %v763, %v761
    %v804 = vpack.c.b16 %v764, %v762
    %v805 = vpack.c.b16 %v767, %v765
    %v806 = vpack.c.b16 %v768, %v766
    %v807 = vpack.c.b16 %v771, %v769
    %v808 = vpack.c.b16 %v772, %v770
    %v809 = vpack.c.b16 %v775, %v773
    %v810 = vpack.c.b16 %v776, %v774
    %v811 = vpack.c.b16 %v779, %v777
    %v812 = vpack.c.b16 %v780, %v778
    %845 = vmatprep.subr.bf16.mxu0 %v796
    %846 = vmatpush1.bf16.msra.mxu0 %v795
    %847 = vmatprep.subr.bf16.mxu0 %v794
    %848 = vmatpush1.bf16.msra.mxu0 %v793
    %849 = vmatprep.subr.bf16.mxu0 %v792
    %850 = vmatpush1.bf16.msra.mxu0 %v791
    %851 = vmatprep.subr.bf16.mxu0 %v790
    %852 = vmatpush1.bf16.msra.mxu0 %v789
    %853 = vmatprep.subr.bf16.mxu0 %v788
    %854 = vmatpush1.bf16.msra.mxu0 %v787
    %855 = vmatprep.subr.bf16.mxu0 %v786
    %856 = vmatpush1.bf16.msra.mxu0 %v785
    %857 = vmatprep.subr.bf16.mxu0 %v784
    %858 = vmatpush1.bf16.msra.mxu0 %v783
    %859 = vmatprep.subr.bf16.mxu0 %v782
    %860 = vmatpush1.bf16.msra.mxu0 %v781
    %861 = vmatprep.subr.bf16.mxu0 %v812
    %862 = vmatpush2.bf16.msra.mxu0 %v811
    %863 = vmatprep.subr.bf16.mxu0 %v810
    %864 = vmatpush2.bf16.msra.mxu0 %v809
    %865 = vmatprep.subr.bf16.mxu0 %v808
    %866 = vmatpush2.bf16.msra.mxu0 %v807
    %867 = vmatprep.subr.bf16.mxu0 %v806
    %868 = vmatpush2.bf16.msra.mxu0 %v805
    %869 = vmatprep.subr.bf16.mxu0 %v804
    %870 = vmatpush2.bf16.msra.mxu0 %v803
    %871 = vmatprep.subr.bf16.mxu0 %v802
    %872 = vmatpush2.bf16.msra.mxu0 %v801
    %873 = vmatprep.subr.bf16.mxu0 %v800
    %874 = vmatpush2.bf16.msra.mxu0 %v799
    %875 = vmatprep.subr.bf16.mxu0 %v798
    %876 = vmatpush2.bf16.msra.mxu0 %v797
    %877 = vmatprep.mubr.bf16.mxu0 %v638
    %878 = vmatmul.mubr.bf16.gmra.mxu0 %v637
    %v879 = vpop.f32.mrf.mxu0
    %v880 = vadd.f32 %v678, %v879
    %v881 = vpop.f32.mrf.mxu0
    %v882 = vadd.f32 %v682, %v881
    %v883 = vpop.f32.mrf.mxu0
    %v884 = vpop.f32.mrf.mxu0
    %885 = vdwg.mxu0
    %v886 = vmax.f32 %v880, 0.0
    %v887 = vmax.f32 %v882, 0.0
    %v888 = vpack.c.bf16 %v886, %v886
    %v889 = vpack.c.bf16 %v887, %v887
    %s890 = scalar_lea.vmem %s5, 128
    %v891 = vld [vmem:[%s890] sm:$0xf]
    %v892 = vld [vmem:[%s890 + $0x4] sm:$0xf]
    %v893 = vld [vmem:[%s890 + $0x8] sm:$0xf]
    %v894 = vld [vmem:[%s890 + $0xc] sm:$0xf]
    %v895 = vld [vmem:[%s890 + $0x10] sm:$0xf]
    %v896 = vld [vmem:[%s890 + $0x14] sm:$0xf]
    %v897 = vld [vmem:[%s890 + $0x18] sm:$0xf]
    %v898 = vld [vmem:[%s890 + $0x1c] sm:$0xf]
    %v899 = vld [vmem:[%s890 + $0x20] sm:$0xf]
    %v900 = vld [vmem:[%s890 + $0x24] sm:$0xf]
    %v901 = vld [vmem:[%s890 + $0x28] sm:$0xf]
    %v902 = vld [vmem:[%s890 + $0x2c] sm:$0xf]
    %v903 = vld [vmem:[%s890 + $0x30] sm:$0xf]
    %v904 = vld [vmem:[%s890 + $0x34] sm:$0xf]
    %v905 = vld [vmem:[%s890 + $0x38] sm:$0xf]
    %v906 = vld [vmem:[%s890 + $0x3c] sm:$0xf]
    %v907 = vld [vmem:[%s890 + $0x40] sm:$0xf]
    %v908 = vld [vmem:[%s890 + $0x44] sm:$0xf]
    %v909 = vld [vmem:[%s890 + $0x48] sm:$0xf]
    %v910 = vld [vmem:[%s890 + $0x4c] sm:$0xf]
    %v911 = vld [vmem:[%s890 + $0x50] sm:$0xf]
    %v912 = vld [vmem:[%s890 + $0x54] sm:$0xf]
    %v913 = vld [vmem:[%s890 + $0x58] sm:$0xf]
    %v914 = vld [vmem:[%s890 + $0x5c] sm:$0xf]
    %v915 = vld [vmem:[%s890 + $0x60] sm:$0xf]
    %v916 = vld [vmem:[%s890 + $0x64] sm:$0xf]
    %v917 = vld [vmem:[%s890 + $0x68] sm:$0xf]
    %v918 = vld [vmem:[%s890 + $0x6c] sm:$0xf]
    %v919 = vld [vmem:[%s890 + $0x70] sm:$0xf]
    %v920 = vld [vmem:[%s890 + $0x74] sm:$0xf]
    %v921 = vld [vmem:[%s890 + $0x78] sm:$0xf]
    %v922 = vld [vmem:[%s890 + $0x7c] sm:$0xf]
    %v923 = vld [vmem:[%s6 + $0x1] sm:$0x1]
    %v924 = vlaneseq
    %v925 = vshrl.u32 %v924, 7
    %v926 = vsub.s32 0, %v925
    %v927 = vrot.slane %v923, %v926
    %v960 = vunpack.c.l.b16 %v891
    %v961 = vunpack.c.l.b16 %v892
    %v962 = vunpack.c.l.b16 %v893
    %v963 = vunpack.c.l.b16 %v894
    %v964 = vunpack.c.l.b16 %v895
    %v965 = vunpack.c.l.b16 %v896
    %v966 = vunpack.c.l.b16 %v897
    %v967 = vunpack.c.l.b16 %v898
    %v968 = vunpack.c.l.b16 %v899
    %v969 = vunpack.c.l.b16 %v900
    %v970 = vunpack.c.l.b16 %v901
    %v971 = vunpack.c.l.b16 %v902
    %v972 = vunpack.c.l.b16 %v903
    %v973 = vunpack.c.l.b16 %v904
    %v974 = vunpack.c.l.b16 %v905
    %v975 = vunpack.c.l.b16 %v906
    %v976 = vunpack.c.l.b16 %v907
    %v977 = vunpack.c.l.b16 %v908
    %v978 = vunpack.c.l.b16 %v909
    %v979 = vunpack.c.l.b16 %v910
    %v980 = vunpack.c.l.b16 %v911
    %v981 = vunpack.c.l.b16 %v912
    %v982 = vunpack.c.l.b16 %v913
    %v983 = vunpack.c.l.b16 %v914
    %v984 = vunpack.c.l.b16 %v915
    %v985 = vunpack.c.l.b16 %v916
    %v986 = vunpack.c.l.b16 %v917
    %v987 = vunpack.c.l.b16 %v918
    %v988 = vunpack.c.l.b16 %v919
    %v989 = vunpack.c.l.b16 %v920
    %v990 = vunpack.c.l.b16 %v921
    %v991 = vunpack.c.l.b16 %v922
    %v992 = vpack.c.b16 %v961, %v960
    %v993 = vpack.c.b16 %v963, %v962
    %v994 = vpack.c.b16 %v965, %v964
    %v995 = vpack.c.b16 %v967, %v966
    %v996 = vpack.c.b16 %v969, %v968
    %v997 = vpack.c.b16 %v971, %v970
    %v998 = vpack.c.b16 %v973, %v972
    %v999 = vpack.c.b16 %v975, %v974
    %v1000 = vpack.c.b16 %v977, %v976
    %v1001 = vpack.c.b16 %v979, %v978
    %v1002 = vpack.c.b16 %v981, %v980
    %v1003 = vpack.c.b16 %v983, %v982
    %v1004 = vpack.c.b16 %v985, %v984
    %v1005 = vpack.c.b16 %v987, %v986
    %v1006 = vpack.c.b16 %v989, %v988
    %v1007 = vpack.c.b16 %v991, %v990
    %1024 = vmatprep.subr.bf16.mxu0 0
    %1025 = vmatpush1.bf16.msra.mxu0 %v999
    %1026 = vmatprep.subr.bf16.mxu0 0
    %1027 = vmatpush1.bf16.msra.mxu0 %v998
    %1028 = vmatprep.subr.bf16.mxu0 0
    %1029 = vmatpush1.bf16.msra.mxu0 %v997
    %1030 = vmatprep.subr.bf16.mxu0 0
    %1031 = vmatpush1.bf16.msra.mxu0 %v996
    %1032 = vmatprep.subr.bf16.mxu0 0
    %1033 = vmatpush1.bf16.msra.mxu0 %v995
    %1034 = vmatprep.subr.bf16.mxu0 0
    %1035 = vmatpush1.bf16.msra.mxu0 %v994
    %1036 = vmatprep.subr.bf16.mxu0 0
    %1037 = vmatpush1.bf16.msra.mxu0 %v993
    %1038 = vmatprep.subr.bf16.mxu0 0
    %1039 = vmatpush1.bf16.msra.mxu0 %v992
    %1040 = vmatprep.subr.bf16.mxu0 0
    %1041 = vmatpush2.bf16.msra.mxu0 %v1007
    %1042 = vmatprep.subr.bf16.mxu0 0
    %1043 = vmatpush2.bf16.msra.mxu0 %v1006
    %1044 = vmatprep.subr.bf16.mxu0 0
    %1045 = vmatpush2.bf16.msra.mxu0 %v1005
    %1046 = vmatprep.subr.bf16.mxu0 0
    %1047 = vmatpush2.bf16.msra.mxu0 %v1004
    %1048 = vmatprep.subr.bf16.mxu0 0
    %1049 = vmatpush2.bf16.msra.mxu0 %v1003
    %1050 = vmatprep.subr.bf16.mxu0 0
    %1051 = vmatpush2.bf16.msra.mxu0 %v1002
    %1052 = vmatprep.subr.bf16.mxu0 0
    %1053 = vmatpush2.bf16.msra.mxu0 %v1001
    %1054 = vmatprep.subr.bf16.mxu0 0
    %1055 = vmatpush2.bf16.msra.mxu0 %v1000
    %1056 = vmatprep.mubr.bf16.mxu0 %v889
    %1057 = vmatmul.mubr.bf16.gmra.mxu0 %v888
    %v1058 = vpop.f32.mrf.mxu0
    %v1059 = vadd.f32 %v927, %v1058
    %v1060 = vpop.f32.mrf.mxu0
    %v1061 = vpop.f32.mrf.mxu0
    %v1062 = vpop.f32.mrf.mxu0
    %1063 = vdwg.mxu0
    %s1064 = scalar_lea.vmem %s7, 8
    %1065 = vst.msk [vmem:[%s1064] sm:$0xff] %vm549, %v1059
    %s1066 = scalar_lea.vmem %s0, 8
    %v1067 = vld [vmem:[%s1066] sm:$0xf]
    %s1068 = scalar_lea.vmem %s1, 64
    %v1069 = vld [vmem:[%s1068] sm:$0xff]
    %v1070 = vld [vmem:[%s1068 + $0x8] sm:$0xff]
    %v1071 = vld [vmem:[%s1068 + $0x10] sm:$0xff]
    %v1072 = vld [vmem:[%s1068 + $0x18] sm:$0xff]
    %s1073 = scalar_lea.vmem %s2, 2
    %v1074 = vld [vmem:[%s1073] ss:$4 sm:$0x3]
    %v1076 = vlaneseq
    %v1077 = vshrl.u32 %v1076, 7
    %v1078 = vsub.s32 0, %v1077
    %v1079 = vrot.slane %v1074, %v1078
    %v1080 = vlaneseq
    %v1081 = vshrl.u32 %v1080, 7
    %v1082 = vsub.s32 1, %v1081
    %v1083 = vrot.slane %v1074, %v1082
    %v1090 = vunpack.c.l.b16 %v1069
    %v1091 = vunpack.c.h.b16 %v1069
    %v1092 = vunpack.c.l.b16 %v1070
    %v1093 = vunpack.c.h.b16 %v1070
    %v1094 = vunpack.c.l.b16 %v1071
    %v1095 = vunpack.c.h.b16 %v1071
    %v1096 = vunpack.c.l.b16 %v1072
    %v1097 = vunpack.c.h.b16 %v1072
    %v1098 = vpack.c.b16 %v1092, %v1090
    %v1099 = vpack.c.b16 %v1093, %v1091
    %v1100 = vpack.c.b16 %v1096, %v1094
    %v1101 = vpack.c.b16 %v1097, %v1095
    %v1107 = vsel %vm78, %v1067, 0
    %1109 = vmatprep.subr.bf16.mxu0 0
    %1110 = vmatpush1.bf16.msra.mxu0 0
    %1111 = vmatprep.subr.bf16.mxu0 0
    %1112 = vmatpush1.bf16.msra.mxu0 0
    %1113 = vmatprep.subr.bf16.mxu0 0
    %1114 = vmatpush1.bf16.msra.mxu0 0
    %1115 = vmatprep.subr.bf16.mxu0 0
    %1116 = vmatpush1.bf16.msra.mxu0 0
    %1117 = vmatprep.subr.bf16.mxu0 0
    %1118 = vmatpush1.bf16.msra.mxu0 0
    %1119 = vmatprep.subr.bf16.mxu0 0
    %1120 = vmatpush1.bf16.msra.mxu0 0
    %1121 = vmatprep.subr.bf16.mxu0 %v1101
    %1122 = vmatpush1.bf16.msra.mxu0 %v1100
    %1123 = vmatprep.subr.bf16.mxu0 %v1099
    %1124 = vmatpush1.bf16.msra.mxu0 %v1098
    %1125 = vmatprep.subr.bf16.mxu0 0
    %1126 = vmatpush2.bf16.msra.mxu0 0
    %1127 = vmatprep.subr.bf16.mxu0 0
    %1128 = vmatpush2.bf16.msra.mxu0 0
    %1129 = vmatprep.subr.bf16.mxu0 0
    %1130 = vmatpush2.bf16.msra.mxu0 0
    %1131 = vmatprep.subr.bf16.mxu0 0
    %1132 = vmatpush2.bf16.msra.mxu0 0
    %1133 = vmatprep.subr.bf16.mxu0 0
    %1134 = vmatpush2.bf16.msra.mxu0 0
    %1135 = vmatprep.subr.bf16.mxu0 0
    %1136 = vmatpush2.bf16.msra.mxu0 0
    %1137 = vmatprep.subr.bf16.mxu0 0
    %1138 = vmatpush2.bf16.msra.mxu0 0
    %1139 = vmatprep.subr.bf16.mxu0 0
    %1140 = vmatpush2.bf16.msra.mxu0 0
    %1141 = vmatprep.mubr.bf16.mxu0 0
    %1142 = vmatmul.mubr.bf16.gmra.mxu0 %v1107
    %v1143 = vpop.f32.mrf.mxu0
    %v1144 = vadd.f32 %v1079, %v1143
    %v1145 = vpop.f32.mrf.mxu0
    %v1146 = vadd.f32 %v1083, %v1145
    %v1147 = vpop.f32.mrf.mxu0
    %v1148 = vpop.f32.mrf.mxu0
    %1149 = vdwg.mxu0
    %v1150 = vmax.f32 %v1144, 0.0
    %v1151 = vmax.f32 %v1146, 0.0
    %v1152 = vpack.c.bf16 %v1150, %v1150
    %v1153 = vpack.c.bf16 %v1151, %v1151
    %s1154 = scalar_lea.vmem [#allocation2], 512
    %v1155 = vld [vmem:[%s1154] sm:$0xff]
    %v1156 = vld [vmem:[%s1154 + $0x8] sm:$0xff]
    %v1157 = vld [vmem:[%s1154 + $0x10] sm:$0xff]
    %v1158 = vld [vmem:[%s1154 + $0x18] sm:$0xff]
    %v1159 = vld [vmem:[%s1154 + $0x20] sm:$0xff]
    %v1160 = vld [vmem:[%s1154 + $0x28] sm:$0xff]
    %v1161 = vld [vmem:[%s1154 + $0x30] sm:$0xff]
    %v1162 = vld [vmem:[%s1154 + $0x38] sm:$0xff]
    %v1163 = vld [vmem:[%s1154 + $0x40] sm:$0xff]
    %v1164 = vld [vmem:[%s1154 + $0x48] sm:$0xff]
    %v1165 = vld [vmem:[%s1154 + $0x50] sm:$0xff]
    %v1166 = vld [vmem:[%s1154 + $0x58] sm:$0xff]
    %v1167 = vld [vmem:[%s1154 + $0x60] sm:$0xff]
    %v1168 = vld [vmem:[%s1154 + $0x68] sm:$0xff]
    %v1169 = vld [vmem:[%s1154 + $0x70] sm:$0xff]
    %v1170 = vld [vmem:[%s1154 + $0x78] sm:$0xff]
    %v1171 = vld [vmem:[%s1154 + $0x80] sm:$0xff]
    %v1172 = vld [vmem:[%s1154 + $0x88] sm:$0xff]
    %v1173 = vld [vmem:[%s1154 + $0x90] sm:$0xff]
    %v1174 = vld [vmem:[%s1154 + $0x98] sm:$0xff]
    %v1175 = vld [vmem:[%s1154 + $0xa0] sm:$0xff]
    %v1176 = vld [vmem:[%s1154 + $0xa8] sm:$0xff]
    %v1177 = vld [vmem:[%s1154 + $0xb0] sm:$0xff]
    %v1178 = vld [vmem:[%s1154 + $0xb8] sm:$0xff]
    %v1179 = vld [vmem:[%s1154 + $0xc0] sm:$0xff]
    %v1180 = vld [vmem:[%s1154 + $0xc8] sm:$0xff]
    %v1181 = vld [vmem:[%s1154 + $0xd0] sm:$0xff]
    %v1182 = vld [vmem:[%s1154 + $0xd8] sm:$0xff]
    %v1183 = vld [vmem:[%s1154 + $0xe0] sm:$0xff]
    %v1184 = vld [vmem:[%s1154 + $0xe8] sm:$0xff]
    %v1185 = vld [vmem:[%s1154 + $0xf0] sm:$0xff]
    %v1186 = vld [vmem:[%s1154 + $0xf8] sm:$0xff]
    %s1187 = scalar_lea.vmem %s4, 2
    %v1188 = vld [vmem:[%s1187] ss:$4 sm:$0x3]
    %v1190 = vlaneseq
    %v1191 = vshrl.u32 %v1190, 7
    %v1192 = vsub.s32 0, %v1191
    %v1193 = vrot.slane %v1188, %v1192
    %v1194 = vlaneseq
    %v1195 = vshrl.u32 %v1194, 7
    %v1196 = vsub.s32 1, %v1195
    %v1197 = vrot.slane %v1188, %v1196
    %v1232 = vunpack.c.l.b16 %v1155
    %v1233 = vunpack.c.h.b16 %v1155
    %v1234 = vunpack.c.l.b16 %v1156
    %v1235 = vunpack.c.h.b16 %v1156
    %v1236 = vunpack.c.l.b16 %v1157
    %v1237 = vunpack.c.h.b16 %v1157
    %v1238 = vunpack.c.l.b16 %v1158
    %v1239 = vunpack.c.h.b16 %v1158
    %v1240 = vunpack.c.l.b16 %v1159
    %v1241 = vunpack.c.h.b16 %v1159
    %v1242 = vunpack.c.l.b16 %v1160
    %v1243 = vunpack.c.h.b16 %v1160
    %v1244 = vunpack.c.l.b16 %v1161
    %v1245 = vunpack.c.h.b16 %v1161
    %v1246 = vunpack.c.l.b16 %v1162
    %v1247 = vunpack.c.h.b16 %v1162
    %v1248 = vunpack.c.l.b16 %v1163
    %v1249 = vunpack.c.h.b16 %v1163
    %v1250 = vunpack.c.l.b16 %v1164
    %v1251 = vunpack.c.h.b16 %v1164
    %v1252 = vunpack.c.l.b16 %v1165
    %v1253 = vunpack.c.h.b16 %v1165
    %v1254 = vunpack.c.l.b16 %v1166
    %v1255 = vunpack.c.h.b16 %v1166
    %v1256 = vunpack.c.l.b16 %v1167
    %v1257 = vunpack.c.h.b16 %v1167
    %v1258 = vunpack.c.l.b16 %v1168
    %v1259 = vunpack.c.h.b16 %v1168
    %v1260 = vunpack.c.l.b16 %v1169
    %v1261 = vunpack.c.h.b16 %v1169
    %v1262 = vunpack.c.l.b16 %v1170
    %v1263 = vunpack.c.h.b16 %v1170
    %v1264 = vunpack.c.l.b16 %v1171
    %v1265 = vunpack.c.h.b16 %v1171
    %v1266 = vunpack.c.l.b16 %v1172
    %v1267 = vunpack.c.h.b16 %v1172
    %v1268 = vunpack.c.l.b16 %v1173
    %v1269 = vunpack.c.h.b16 %v1173
    %v1270 = vunpack.c.l.b16 %v1174
    %v1271 = vunpack.c.h.b16 %v1174
    %v1272 = vunpack.c.l.b16 %v1175
    %v1273 = vunpack.c.h.b16 %v1175
    %v1274 = vunpack.c.l.b16 %v1176
    %v1275 = vunpack.c.h.b16 %v1176
    %v1276 = vunpack.c.l.b16 %v1177
    %v1277 = vunpack.c.h.b16 %v1177
    %v1278 = vunpack.c.l.b16 %v1178
    %v1279 = vunpack.c.h.b16 %v1178
    %v1280 = vunpack.c.l.b16 %v1179
    %v1281 = vunpack.c.h.b16 %v1179
    %v1282 = vunpack.c.l.b16 %v1180
    %v1283 = vunpack.c.h.b16 %v1180
    %v1284 = vunpack.c.l.b16 %v1181
    %v1285 = vunpack.c.h.b16 %v1181
    %v1286 = vunpack.c.l.b16 %v1182
    %v1287 = vunpack.c.h.b16 %v1182
    %v1288 = vunpack.c.l.b16 %v1183
    %v1289 = vunpack.c.h.b16 %v1183
    %v1290 = vunpack.c.l.b16 %v1184
    %v1291 = vunpack.c.h.b16 %v1184
    %v1292 = vunpack.c.l.b16 %v1185
    %v1293 = vunpack.c.h.b16 %v1185
    %v1294 = vunpack.c.l.b16 %v1186
    %v1295 = vunpack.c.h.b16 %v1186
    %v1296 = vpack.c.b16 %v1234, %v1232
    %v1297 = vpack.c.b16 %v1235, %v1233
    %v1298 = vpack.c.b16 %v1238, %v1236
    %v1299 = vpack.c.b16 %v1239, %v1237
    %v1300 = vpack.c.b16 %v1242, %v1240
    %v1301 = vpack.c.b16 %v1243, %v1241
    %v1302 = vpack.c.b16 %v1246, %v1244
    %v1303 = vpack.c.b16 %v1247, %v1245
    %v1304 = vpack.c.b16 %v1250, %v1248
    %v1305 = vpack.c.b16 %v1251, %v1249
    %v1306 = vpack.c.b16 %v1254, %v1252
    %v1307 = vpack.c.b16 %v1255, %v1253
    %v1308 = vpack.c.b16 %v1258, %v1256
    %v1309 = vpack.c.b16 %v1259, %v1257
    %v1310 = vpack.c.b16 %v1262, %v1260
    %v1311 = vpack.c.b16 %v1263, %v1261
    %v1312 = vpack.c.b16 %v1266, %v1264
    %v1313 = vpack.c.b16 %v1267, %v1265
    %v1314 = vpack.c.b16 %v1270, %v1268
    %v1315 = vpack.c.b16 %v1271, %v1269
    %v1316 = vpack.c.b16 %v1274, %v1272
    %v1317 = vpack.c.b16 %v1275, %v1273
    %v1318 = vpack.c.b16 %v1278, %v1276
    %v1319 = vpack.c.b16 %v1279, %v1277
    %v1320 = vpack.c.b16 %v1282, %v1280
    %v1321 = vpack.c.b16 %v1283, %v1281
    %v1322 = vpack.c.b16 %v1286, %v1284
    %v1323 = vpack.c.b16 %v1287, %v1285
    %v1324 = vpack.c.b16 %v1290, %v1288
    %v1325 = vpack.c.b16 %v1291, %v1289
    %v1326 = vpack.c.b16 %v1294, %v1292
    %v1327 = vpack.c.b16 %v1295, %v1293
    %1360 = vmatprep.subr.bf16.mxu0 %v1311
    %1361 = vmatpush1.bf16.msra.mxu0 %v1310
    %1362 = vmatprep.subr.bf16.mxu0 %v1309
    %1363 = vmatpush1.bf16.msra.mxu0 %v1308
    %1364 = vmatprep.subr.bf16.mxu0 %v1307
    %1365 = vmatpush1.bf16.msra.mxu0 %v1306
    %1366 = vmatprep.subr.bf16.mxu0 %v1305
    %1367 = vmatpush1.bf16.msra.mxu0 %v1304
    %1368 = vmatprep.subr.bf16.mxu0 %v1303
    %1369 = vmatpush1.bf16.msra.mxu0 %v1302
    %1370 = vmatprep.subr.bf16.mxu0 %v1301
    %1371 = vmatpush1.bf16.msra.mxu0 %v1300
    %1372 = vmatprep.subr.bf16.mxu0 %v1299
    %1373 = vmatpush1.bf16.msra.mxu0 %v1298
    %1374 = vmatprep.subr.bf16.mxu0 %v1297
    %1375 = vmatpush1.bf16.msra.mxu0 %v1296
    %1376 = vmatprep.subr.bf16.mxu0 %v1327
    %1377 = vmatpush2.bf16.msra.mxu0 %v1326
    %1378 = vmatprep.subr.bf16.mxu0 %v1325
    %1379 = vmatpush2.bf16.msra.mxu0 %v1324
    %1380 = vmatprep.subr.bf16.mxu0 %v1323
    %1381 = vmatpush2.bf16.msra.mxu0 %v1322
    %1382 = vmatprep.subr.bf16.mxu0 %v1321
    %1383 = vmatpush2.bf16.msra.mxu0 %v1320
    %1384 = vmatprep.subr.bf16.mxu0 %v1319
    %1385 = vmatpush2.bf16.msra.mxu0 %v1318
    %1386 = vmatprep.subr.bf16.mxu0 %v1317
    %1387 = vmatpush2.bf16.msra.mxu0 %v1316
    %1388 = vmatprep.subr.bf16.mxu0 %v1315
    %1389 = vmatpush2.bf16.msra.mxu0 %v1314
    %1390 = vmatprep.subr.bf16.mxu0 %v1313
    %1391 = vmatpush2.bf16.msra.mxu0 %v1312
    %1392 = vmatprep.mubr.bf16.mxu0 %v1153
    %1393 = vmatmul.mubr.bf16.gmra.mxu0 %v1152
    %v1394 = vpop.f32.mrf.mxu0
    %v1395 = vadd.f32 %v1193, %v1394
    %v1396 = vpop.f32.mrf.mxu0
    %v1397 = vadd.f32 %v1197, %v1396
    %v1398 = vpop.f32.mrf.mxu0
    %v1399 = vpop.f32.mrf.mxu0
    %1400 = vdwg.mxu0
    %v1401 = vmax.f32 %v1395, 0.0
    %v1402 = vmax.f32 %v1397, 0.0
    %v1403 = vpack.c.bf16 %v1401, %v1401
    %v1404 = vpack.c.bf16 %v1402, %v1402
    %s1405 = scalar_lea.vmem %s5, 256
    %v1406 = vld [vmem:[%s1405] sm:$0xf]
    %v1407 = vld [vmem:[%s1405 + $0x4] sm:$0xf]
    %v1408 = vld [vmem:[%s1405 + $0x8] sm:$0xf]
    %v1409 = vld [vmem:[%s1405 + $0xc] sm:$0xf]
    %v1410 = vld [vmem:[%s1405 + $0x10] sm:$0xf]
    %v1411 = vld [vmem:[%s1405 + $0x14] sm:$0xf]
    %v1412 = vld [vmem:[%s1405 + $0x18] sm:$0xf]
    %v1413 = vld [vmem:[%s1405 + $0x1c] sm:$0xf]
    %v1414 = vld [vmem:[%s1405 + $0x20] sm:$0xf]
    %v1415 = vld [vmem:[%s1405 + $0x24] sm:$0xf]
    %v1416 = vld [vmem:[%s1405 + $0x28] sm:$0xf]
    %v1417 = vld [vmem:[%s1405 + $0x2c] sm:$0xf]
    %v1418 = vld [vmem:[%s1405 + $0x30] sm:$0xf]
    %v1419 = vld [vmem:[%s1405 + $0x34] sm:$0xf]
    %v1420 = vld [vmem:[%s1405 + $0x38] sm:$0xf]
    %v1421 = vld [vmem:[%s1405 + $0x3c] sm:$0xf]
    %v1422 = vld [vmem:[%s1405 + $0x40] sm:$0xf]
    %v1423 = vld [vmem:[%s1405 + $0x44] sm:$0xf]
    %v1424 = vld [vmem:[%s1405 + $0x48] sm:$0xf]
    %v1425 = vld [vmem:[%s1405 + $0x4c] sm:$0xf]
    %v1426 = vld [vmem:[%s1405 + $0x50] sm:$0xf]
    %v1427 = vld [vmem:[%s1405 + $0x54] sm:$0xf]
    %v1428 = vld [vmem:[%s1405 + $0x58] sm:$0xf]
    %v1429 = vld [vmem:[%s1405 + $0x5c] sm:$0xf]
    %v1430 = vld [vmem:[%s1405 + $0x60] sm:$0xf]
    %v1431 = vld [vmem:[%s1405 + $0x64] sm:$0xf]
    %v1432 = vld [vmem:[%s1405 + $0x68] sm:$0xf]
    %v1433 = vld [vmem:[%s1405 + $0x6c] sm:$0xf]
    %v1434 = vld [vmem:[%s1405 + $0x70] sm:$0xf]
    %v1435 = vld [vmem:[%s1405 + $0x74] sm:$0xf]
    %v1436 = vld [vmem:[%s1405 + $0x78] sm:$0xf]
    %v1437 = vld [vmem:[%s1405 + $0x7c] sm:$0xf]
    %v1438 = vld [vmem:[%s6 + $0x2] sm:$0x1]
    %v1439 = vlaneseq
    %v1440 = vshrl.u32 %v1439, 7
    %v1441 = vsub.s32 0, %v1440
    %v1442 = vrot.slane %v1438, %v1441
    %v1475 = vunpack.c.l.b16 %v1406
    %v1476 = vunpack.c.l.b16 %v1407
    %v1477 = vunpack.c.l.b16 %v1408
    %v1478 = vunpack.c.l.b16 %v1409
    %v1479 = vunpack.c.l.b16 %v1410
    %v1480 = vunpack.c.l.b16 %v1411
    %v1481 = vunpack.c.l.b16 %v1412
    %v1482 = vunpack.c.l.b16 %v1413
    %v1483 = vunpack.c.l.b16 %v1414
    %v1484 = vunpack.c.l.b16 %v1415
    %v1485 = vunpack.c.l.b16 %v1416
    %v1486 = vunpack.c.l.b16 %v1417
    %v1487 = vunpack.c.l.b16 %v1418
    %v1488 = vunpack.c.l.b16 %v1419
    %v1489 = vunpack.c.l.b16 %v1420
    %v1490 = vunpack.c.l.b16 %v1421
    %v1491 = vunpack.c.l.b16 %v1422
    %v1492 = vunpack.c.l.b16 %v1423
    %v1493 = vunpack.c.l.b16 %v1424
    %v1494 = vunpack.c.l.b16 %v1425
    %v1495 = vunpack.c.l.b16 %v1426
    %v1496 = vunpack.c.l.b16 %v1427
    %v1497 = vunpack.c.l.b16 %v1428
    %v1498 = vunpack.c.l.b16 %v1429
    %v1499 = vunpack.c.l.b16 %v1430
    %v1500 = vunpack.c.l.b16 %v1431
    %v1501 = vunpack.c.l.b16 %v1432
    %v1502 = vunpack.c.l.b16 %v1433
    %v1503 = vunpack.c.l.b16 %v1434
    %v1504 = vunpack.c.l.b16 %v1435
    %v1505 = vunpack.c.l.b16 %v1436
    %v1506 = vunpack.c.l.b16 %v1437
    %v1507 = vpack.c.b16 %v1476, %v1475
    %v1508 = vpack.c.b16 %v1478, %v1477
    %v1509 = vpack.c.b16 %v1480, %v1479
    %v1510 = vpack.c.b16 %v1482, %v1481
    %v1511 = vpack.c.b16 %v1484, %v1483
    %v1512 = vpack.c.b16 %v1486, %v1485
    %v1513 = vpack.c.b16 %v1488, %v1487
    %v1514 = vpack.c.b16 %v1490, %v1489
    %v1515 = vpack.c.b16 %v1492, %v1491
    %v1516 = vpack.c.b16 %v1494, %v1493
    %v1517 = vpack.c.b16 %v1496, %v1495
    %v1518 = vpack.c.b16 %v1498, %v1497
    %v1519 = vpack.c.b16 %v1500, %v1499
    %v1520 = vpack.c.b16 %v1502, %v1501
    %v1521 = vpack.c.b16 %v1504, %v1503
    %v1522 = vpack.c.b16 %v1506, %v1505
    %1539 = vmatprep.subr.bf16.mxu0 0
    %1540 = vmatpush1.bf16.msra.mxu0 %v1514
    %1541 = vmatprep.subr.bf16.mxu0 0
    %1542 = vmatpush1.bf16.msra.mxu0 %v1513
    %1543 = vmatprep.subr.bf16.mxu0 0
    %1544 = vmatpush1.bf16.msra.mxu0 %v1512
    %1545 = vmatprep.subr.bf16.mxu0 0
    %1546 = vmatpush1.bf16.msra.mxu0 %v1511
    %1547 = vmatprep.subr.bf16.mxu0 0
    %1548 = vmatpush1.bf16.msra.mxu0 %v1510
    %1549 = vmatprep.subr.bf16.mxu0 0
    %1550 = vmatpush1.bf16.msra.mxu0 %v1509
    %1551 = vmatprep.subr.bf16.mxu0 0
    %1552 = vmatpush1.bf16.msra.mxu0 %v1508
    %1553 = vmatprep.subr.bf16.mxu0 0
    %1554 = vmatpush1.bf16.msra.mxu0 %v1507
    %1555 = vmatprep.subr.bf16.mxu0 0
    %1556 = vmatpush2.bf16.msra.mxu0 %v1522
    %1557 = vmatprep.subr.bf16.mxu0 0
    %1558 = vmatpush2.bf16.msra.mxu0 %v1521
    %1559 = vmatprep.subr.bf16.mxu0 0
    %1560 = vmatpush2.bf16.msra.mxu0 %v1520
    %1561 = vmatprep.subr.bf16.mxu0 0
    %1562 = vmatpush2.bf16.msra.mxu0 %v1519
    %1563 = vmatprep.subr.bf16.mxu0 0
    %1564 = vmatpush2.bf16.msra.mxu0 %v1518
    %1565 = vmatprep.subr.bf16.mxu0 0
    %1566 = vmatpush2.bf16.msra.mxu0 %v1517
    %1567 = vmatprep.subr.bf16.mxu0 0
    %1568 = vmatpush2.bf16.msra.mxu0 %v1516
    %1569 = vmatprep.subr.bf16.mxu0 0
    %1570 = vmatpush2.bf16.msra.mxu0 %v1515
    %1571 = vmatprep.mubr.bf16.mxu0 %v1404
    %1572 = vmatmul.mubr.bf16.gmra.mxu0 %v1403
    %v1573 = vpop.f32.mrf.mxu0
    %v1574 = vadd.f32 %v1442, %v1573
    %v1575 = vpop.f32.mrf.mxu0
    %v1576 = vpop.f32.mrf.mxu0
    %v1577 = vpop.f32.mrf.mxu0
    %1578 = vdwg.mxu0
    %s1579 = scalar_lea.vmem %s7, 16
    %1580 = vst.msk [vmem:[%s1579] sm:$0xff] %vm549, %v1574
    %s1581 = scalar_lea.vmem %s0, 12
    %v1582 = vld [vmem:[%s1581] sm:$0xf]
    %s1583 = scalar_lea.vmem %s1, 96
    %v1584 = vld [vmem:[%s1583] sm:$0xff]
    %v1585 = vld [vmem:[%s1583 + $0x8] sm:$0xff]
    %v1586 = vld [vmem:[%s1583 + $0x10] sm:$0xff]
    %v1587 = vld [vmem:[%s1583 + $0x18] sm:$0xff]
    %s1588 = scalar_lea.vmem %s2, 3
    %v1589 = vld [vmem:[%s1588] ss:$4 sm:$0x3]
    %v1591 = vlaneseq
    %v1592 = vshrl.u32 %v1591, 7
    %v1593 = vsub.s32 0, %v1592
    %v1594 = vrot.slane %v1589, %v1593
    %v1595 = vlaneseq
    %v1596 = vshrl.u32 %v1595, 7
    %v1597 = vsub.s32 1, %v1596
    %v1598 = vrot.slane %v1589, %v1597
    %v1605 = vunpack.c.l.b16 %v1584
    %v1606 = vunpack.c.h.b16 %v1584
    %v1607 = vunpack.c.l.b16 %v1585
    %v1608 = vunpack.c.h.b16 %v1585
    %v1609 = vunpack.c.l.b16 %v1586
    %v1610 = vunpack.c.h.b16 %v1586
    %v1611 = vunpack.c.l.b16 %v1587
    %v1612 = vunpack.c.h.b16 %v1587
    %v1613 = vpack.c.b16 %v1607, %v1605
    %v1614 = vpack.c.b16 %v1608, %v1606
    %v1615 = vpack.c.b16 %v1611, %v1609
    %v1616 = vpack.c.b16 %v1612, %v1610
    %v1622 = vsel %vm78, %v1582, 0
    %1624 = vmatprep.subr.bf16.mxu0 0
    %1625 = vmatpush1.bf16.msra.mxu0 0
    %1626 = vmatprep.subr.bf16.mxu0 0
    %1627 = vmatpush1.bf16.msra.mxu0 0
    %1628 = vmatprep.subr.bf16.mxu0 0
    %1629 = vmatpush1.bf16.msra.mxu0 0
    %1630 = vmatprep.subr.bf16.mxu0 0
    %1631 = vmatpush1.bf16.msra.mxu0 0
    %1632 = vmatprep.subr.bf16.mxu0 0
    %1633 = vmatpush1.bf16.msra.mxu0 0
    %1634 = vmatprep.subr.bf16.mxu0 0
    %1635 = vmatpush1.bf16.msra.mxu0 0
    %1636 = vmatprep.subr.bf16.mxu0 %v1616
    %1637 = vmatpush1.bf16.msra.mxu0 %v1615
    %1638 = vmatprep.subr.bf16.mxu0 %v1614
    %1639 = vmatpush1.bf16.msra.mxu0 %v1613
    %1640 = vmatprep.subr.bf16.mxu0 0
    %1641 = vmatpush2.bf16.msra.mxu0 0
    %1642 = vmatprep.subr.bf16.mxu0 0
    %1643 = vmatpush2.bf16.msra.mxu0 0
    %1644 = vmatprep.subr.bf16.mxu0 0
    %1645 = vmatpush2.bf16.msra.mxu0 0
    %1646 = vmatprep.subr.bf16.mxu0 0
    %1647 = vmatpush2.bf16.msra.mxu0 0
    %1648 = vmatprep.subr.bf16.mxu0 0
    %1649 = vmatpush2.bf16.msra.mxu0 0
    %1650 = vmatprep.subr.bf16.mxu0 0
    %1651 = vmatpush2.bf16.msra.mxu0 0
    %1652 = vmatprep.subr.bf16.mxu0 0
    %1653 = vmatpush2.bf16.msra.mxu0 0
    %1654 = vmatprep.subr.bf16.mxu0 0
    %1655 = vmatpush2.bf16.msra.mxu0 0
    %1656 = vmatprep.mubr.bf16.mxu0 0
    %1657 = vmatmul.mubr.bf16.gmra.mxu0 %v1622
    %v1658 = vpop.f32.mrf.mxu0
    %v1659 = vadd.f32 %v1594, %v1658
    %v1660 = vpop.f32.mrf.mxu0
    %v1661 = vadd.f32 %v1598, %v1660
    %v1662 = vpop.f32.mrf.mxu0
    %v1663 = vpop.f32.mrf.mxu0
    %1664 = vdwg.mxu0
    %v1665 = vmax.f32 %v1659, 0.0
    %v1666 = vmax.f32 %v1661, 0.0
    %v1667 = vpack.c.bf16 %v1665, %v1665
    %v1668 = vpack.c.bf16 %v1666, %v1666
    %s1669 = scalar_lea.vmem [#allocation2], 768
    %v1670 = vld [vmem:[%s1669] sm:$0xff]
    %v1671 = vld [vmem:[%s1669 + $0x8] sm:$0xff]
    %v1672 = vld [vmem:[%s1669 + $0x10] sm:$0xff]
    %v1673 = vld [vmem:[%s1669 + $0x18] sm:$0xff]
    %v1674 = vld [vmem:[%s1669 + $0x20] sm:$0xff]
    %v1675 = vld [vmem:[%s1669 + $0x28] sm:$0xff]
    %v1676 = vld [vmem:[%s1669 + $0x30] sm:$0xff]
    %v1677 = vld [vmem:[%s1669 + $0x38] sm:$0xff]
    %v1678 = vld [vmem:[%s1669 + $0x40] sm:$0xff]
    %v1679 = vld [vmem:[%s1669 + $0x48] sm:$0xff]
    %v1680 = vld [vmem:[%s1669 + $0x50] sm:$0xff]
    %v1681 = vld [vmem:[%s1669 + $0x58] sm:$0xff]
    %v1682 = vld [vmem:[%s1669 + $0x60] sm:$0xff]
    %v1683 = vld [vmem:[%s1669 + $0x68] sm:$0xff]
    %v1684 = vld [vmem:[%s1669 + $0x70] sm:$0xff]
    %v1685 = vld [vmem:[%s1669 + $0x78] sm:$0xff]
    %v1686 = vld [vmem:[%s1669 + $0x80] sm:$0xff]
    %v1687 = vld [vmem:[%s1669 + $0x88] sm:$0xff]
    %v1688 = vld [vmem:[%s1669 + $0x90] sm:$0xff]
    %v1689 = vld [vmem:[%s1669 + $0x98] sm:$0xff]
    %v1690 = vld [vmem:[%s1669 + $0xa0] sm:$0xff]
    %v1691 = vld [vmem:[%s1669 + $0xa8] sm:$0xff]
    %v1692 = vld [vmem:[%s1669 + $0xb0] sm:$0xff]
    %v1693 = vld [vmem:[%s1669 + $0xb8] sm:$0xff]
    %v1694 = vld [vmem:[%s1669 + $0xc0] sm:$0xff]
    %v1695 = vld [vmem:[%s1669 + $0xc8] sm:$0xff]
    %v1696 = vld [vmem:[%s1669 + $0xd0] sm:$0xff]
    %v1697 = vld [vmem:[%s1669 + $0xd8] sm:$0xff]
    %v1698 = vld [vmem:[%s1669 + $0xe0] sm:$0xff]
    %v1699 = vld [vmem:[%s1669 + $0xe8] sm:$0xff]
    %v1700 = vld [vmem:[%s1669 + $0xf0] sm:$0xff]
    %v1701 = vld [vmem:[%s1669 + $0xf8] sm:$0xff]
    %s1702 = scalar_lea.vmem %s4, 3
    %v1703 = vld [vmem:[%s1702] ss:$4 sm:$0x3]
    %v1705 = vlaneseq
    %v1706 = vshrl.u32 %v1705, 7
    %v1707 = vsub.s32 0, %v1706
    %v1708 = vrot.slane %v1703, %v1707
    %v1709 = vlaneseq
    %v1710 = vshrl.u32 %v1709, 7
    %v1711 = vsub.s32 1, %v1710
    %v1712 = vrot.slane %v1703, %v1711
    %v1747 = vunpack.c.l.b16 %v1670
    %v1748 = vunpack.c.h.b16 %v1670
    %v1749 = vunpack.c.l.b16 %v1671
    %v1750 = vunpack.c.h.b16 %v1671
    %v1751 = vunpack.c.l.b16 %v1672
    %v1752 = vunpack.c.h.b16 %v1672
    %v1753 = vunpack.c.l.b16 %v1673
    %v1754 = vunpack.c.h.b16 %v1673
    %v1755 = vunpack.c.l.b16 %v1674
    %v1756 = vunpack.c.h.b16 %v1674
    %v1757 = vunpack.c.l.b16 %v1675
    %v1758 = vunpack.c.h.b16 %v1675
    %v1759 = vunpack.c.l.b16 %v1676
    %v1760 = vunpack.c.h.b16 %v1676
    %v1761 = vunpack.c.l.b16 %v1677
    %v1762 = vunpack.c.h.b16 %v1677
    %v1763 = vunpack.c.l.b16 %v1678
    %v1764 = vunpack.c.h.b16 %v1678
    %v1765 = vunpack.c.l.b16 %v1679
    %v1766 = vunpack.c.h.b16 %v1679
    %v1767 = vunpack.c.l.b16 %v1680
    %v1768 = vunpack.c.h.b16 %v1680
    %v1769 = vunpack.c.l.b16 %v1681
    %v1770 = vunpack.c.h.b16 %v1681
    %v1771 = vunpack.c.l.b16 %v1682
    %v1772 = vunpack.c.h.b16 %v1682
    %v1773 = vunpack.c.l.b16 %v1683
    %v1774 = vunpack.c.h.b16 %v1683
    %v1775 = vunpack.c.l.b16 %v1684
    %v1776 = vunpack.c.h.b16 %v1684
    %v1777 = vunpack.c.l.b16 %v1685
    %v1778 = vunpack.c.h.b16 %v1685
    %v1779 = vunpack.c.l.b16 %v1686
    %v1780 = vunpack.c.h.b16 %v1686
    %v1781 = vunpack.c.l.b16 %v1687
    %v1782 = vunpack.c.h.b16 %v1687
    %v1783 = vunpack.c.l.b16 %v1688
    %v1784 = vunpack.c.h.b16 %v1688
    %v1785 = vunpack.c.l.b16 %v1689
    %v1786 = vunpack.c.h.b16 %v1689
    %v1787 = vunpack.c.l.b16 %v1690
    %v1788 = vunpack.c.h.b16 %v1690
    %v1789 = vunpack.c.l.b16 %v1691
    %v1790 = vunpack.c.h.b16 %v1691
    %v1791 = vunpack.c.l.b16 %v1692
    %v1792 = vunpack.c.h.b16 %v1692
    %v1793 = vunpack.c.l.b16 %v1693
    %v1794 = vunpack.c.h.b16 %v1693
    %v1795 = vunpack.c.l.b16 %v1694
    %v1796 = vunpack.c.h.b16 %v1694
    %v1797 = vunpack.c.l.b16 %v1695
    %v1798 = vunpack.c.h.b16 %v1695
    %v1799 = vunpack.c.l.b16 %v1696
    %v1800 = vunpack.c.h.b16 %v1696
    %v1801 = vunpack.c.l.b16 %v1697
    %v1802 = vunpack.c.h.b16 %v1697
    %v1803 = vunpack.c.l.b16 %v1698
    %v1804 = vunpack.c.h.b16 %v1698
    %v1805 = vunpack.c.l.b16 %v1699
    %v1806 = vunpack.c.h.b16 %v1699
    %v1807 = vunpack.c.l.b16 %v1700
    %v1808 = vunpack.c.h.b16 %v1700
    %v1809 = vunpack.c.l.b16 %v1701
    %v1810 = vunpack.c.h.b16 %v1701
    %v1811 = vpack.c.b16 %v1749, %v1747
    %v1812 = vpack.c.b16 %v1750, %v1748
    %v1813 = vpack.c.b16 %v1753, %v1751
    %v1814 = vpack.c.b16 %v1754, %v1752
    %v1815 = vpack.c.b16 %v1757, %v1755
    %v1816 = vpack.c.b16 %v1758, %v1756
    %v1817 = vpack.c.b16 %v1761, %v1759
    %v1818 = vpack.c.b16 %v1762, %v1760
    %v1819 = vpack.c.b16 %v1765, %v1763
    %v1820 = vpack.c.b16 %v1766, %v1764
    %v1821 = vpack.c.b16 %v1769, %v1767
    %v1822 = vpack.c.b16 %v1770, %v1768
    %v1823 = vpack.c.b16 %v1773, %v1771
    %v1824 = vpack.c.b16 %v1774, %v1772
    %v1825 = vpack.c.b16 %v1777, %v1775
    %v1826 = vpack.c.b16 %v1778, %v1776
    %v1827 = vpack.c.b16 %v1781, %v1779
    %v1828 = vpack.c.b16 %v1782, %v1780
    %v1829 = vpack.c.b16 %v1785, %v1783
    %v1830 = vpack.c.b16 %v1786, %v1784
    %v1831 = vpack.c.b16 %v1789, %v1787
    %v1832 = vpack.c.b16 %v1790, %v1788
    %v1833 = vpack.c.b16 %v1793, %v1791
    %v1834 = vpack.c.b16 %v1794, %v1792
    %v1835 = vpack.c.b16 %v1797, %v1795
    %v1836 = vpack.c.b16 %v1798, %v1796
    %v1837 = vpack.c.b16 %v1801, %v1799
    %v1838 = vpack.c.b16 %v1802, %v1800
    %v1839 = vpack.c.b16 %v1805, %v1803
    %v1840 = vpack.c.b16 %v1806, %v1804
    %v1841 = vpack.c.b16 %v1809, %v1807
    %v1842 = vpack.c.b16 %v1810, %v1808
    %1875 = vmatprep.subr.bf16.mxu0 %v1826
    %1876 = vmatpush1.bf16.msra.mxu0 %v1825
    %1877 = vmatprep.subr.bf16.mxu0 %v1824
    %1878 = vmatpush1.bf16.msra.mxu0 %v1823
    %1879 = vmatprep.subr.bf16.mxu0 %v1822
    %1880 = vmatpush1.bf16.msra.mxu0 %v1821
    %1881 = vmatprep.subr.bf16.mxu0 %v1820
    %1882 = vmatpush1.bf16.msra.mxu0 %v1819
    %1883 = vmatprep.subr.bf16.mxu0 %v1818
    %1884 = vmatpush1.bf16.msra.mxu0 %v1817
    %1885 = vmatprep.subr.bf16.mxu0 %v1816
    %1886 = vmatpush1.bf16.msra.mxu0 %v1815
    %1887 = vmatprep.subr.bf16.mxu0 %v1814
    %1888 = vmatpush1.bf16.msra.mxu0 %v1813
    %1889 = vmatprep.subr.bf16.mxu0 %v1812
    %1890 = vmatpush1.bf16.msra.mxu0 %v1811
    %1891 = vmatprep.subr.bf16.mxu0 %v1842
    %1892 = vmatpush2.bf16.msra.mxu0 %v1841
    %1893 = vmatprep.subr.bf16.mxu0 %v1840
    %1894 = vmatpush2.bf16.msra.mxu0 %v1839
    %1895 = vmatprep.subr.bf16.mxu0 %v1838
    %1896 = vmatpush2.bf16.msra.mxu0 %v1837
    %1897 = vmatprep.subr.bf16.mxu0 %v1836
    %1898 = vmatpush2.bf16.msra.mxu0 %v1835
    %1899 = vmatprep.subr.bf16.mxu0 %v1834
    %1900 = vmatpush2.bf16.msra.mxu0 %v1833
    %1901 = vmatprep.subr.bf16.mxu0 %v1832
    %1902 = vmatpush2.bf16.msra.mxu0 %v1831
    %1903 = vmatprep.subr.bf16.mxu0 %v1830
    %1904 = vmatpush2.bf16.msra.mxu0 %v1829
    %1905 = vmatprep.subr.bf16.mxu0 %v1828
    %1906 = vmatpush2.bf16.msra.mxu0 %v1827
    %1907 = vmatprep.mubr.bf16.mxu0 %v1668
    %1908 = vmatmul.mubr.bf16.gmra.mxu0 %v1667
    %v1909 = vpop.f32.mrf.mxu0
    %v1910 = vadd.f32 %v1708, %v1909
    %v1911 = vpop.f32.mrf.mxu0
    %v1912 = vadd.f32 %v1712, %v1911
    %v1913 = vpop.f32.mrf.mxu0
    %v1914 = vpop.f32.mrf.mxu0
    %1915 = vdwg.mxu0
    %v1916 = vmax.f32 %v1910, 0.0
    %v1917 = vmax.f32 %v1912, 0.0
    %v1918 = vpack.c.bf16 %v1916, %v1916
    %v1919 = vpack.c.bf16 %v1917, %v1917
    %s1920 = scalar_lea.vmem %s5, 384
    %v1921 = vld [vmem:[%s1920] sm:$0xf]
    %v1922 = vld [vmem:[%s1920 + $0x4] sm:$0xf]
    %v1923 = vld [vmem:[%s1920 + $0x8] sm:$0xf]
    %v1924 = vld [vmem:[%s1920 + $0xc] sm:$0xf]
    %v1925 = vld [vmem:[%s1920 + $0x10] sm:$0xf]
    %v1926 = vld [vmem:[%s1920 + $0x14] sm:$0xf]
    %v1927 = vld [vmem:[%s1920 + $0x18] sm:$0xf]
    %v1928 = vld [vmem:[%s1920 + $0x1c] sm:$0xf]
    %v1929 = vld [vmem:[%s1920 + $0x20] sm:$0xf]
    %v1930 = vld [vmem:[%s1920 + $0x24] sm:$0xf]
    %v1931 = vld [vmem:[%s1920 + $0x28] sm:$0xf]
    %v1932 = vld [vmem:[%s1920 + $0x2c] sm:$0xf]
    %v1933 = vld [vmem:[%s1920 + $0x30] sm:$0xf]
    %v1934 = vld [vmem:[%s1920 + $0x34] sm:$0xf]
    %v1935 = vld [vmem:[%s1920 + $0x38] sm:$0xf]
    %v1936 = vld [vmem:[%s1920 + $0x3c] sm:$0xf]
    %v1937 = vld [vmem:[%s1920 + $0x40] sm:$0xf]
    %v1938 = vld [vmem:[%s1920 + $0x44] sm:$0xf]
    %v1939 = vld [vmem:[%s1920 + $0x48] sm:$0xf]
    %v1940 = vld [vmem:[%s1920 + $0x4c] sm:$0xf]
    %v1941 = vld [vmem:[%s1920 + $0x50] sm:$0xf]
    %v1942 = vld [vmem:[%s1920 + $0x54] sm:$0xf]
    %v1943 = vld [vmem:[%s1920 + $0x58] sm:$0xf]
    %v1944 = vld [vmem:[%s1920 + $0x5c] sm:$0xf]
    %v1945 = vld [vmem:[%s1920 + $0x60] sm:$0xf]
    %v1946 = vld [vmem:[%s1920 + $0x64] sm:$0xf]
    %v1947 = vld [vmem:[%s1920 + $0x68] sm:$0xf]
    %v1948 = vld [vmem:[%s1920 + $0x6c] sm:$0xf]
    %v1949 = vld [vmem:[%s1920 + $0x70] sm:$0xf]
    %v1950 = vld [vmem:[%s1920 + $0x74] sm:$0xf]
    %v1951 = vld [vmem:[%s1920 + $0x78] sm:$0xf]
    %v1952 = vld [vmem:[%s1920 + $0x7c] sm:$0xf]
    %v1953 = vld [vmem:[%s6 + $0x3] sm:$0x1]
    %v1954 = vlaneseq
    %v1955 = vshrl.u32 %v1954, 7
    %v1956 = vsub.s32 0, %v1955
    %v1957 = vrot.slane %v1953, %v1956
    %v1990 = vunpack.c.l.b16 %v1921
    %v1991 = vunpack.c.l.b16 %v1922
    %v1992 = vunpack.c.l.b16 %v1923
    %v1993 = vunpack.c.l.b16 %v1924
    %v1994 = vunpack.c.l.b16 %v1925
    %v1995 = vunpack.c.l.b16 %v1926
    %v1996 = vunpack.c.l.b16 %v1927
    %v1997 = vunpack.c.l.b16 %v1928
    %v1998 = vunpack.c.l.b16 %v1929
    %v1999 = vunpack.c.l.b16 %v1930
    %v2000 = vunpack.c.l.b16 %v1931
    %v2001 = vunpack.c.l.b16 %v1932
    %v2002 = vunpack.c.l.b16 %v1933
    %v2003 = vunpack.c.l.b16 %v1934
    %v2004 = vunpack.c.l.b16 %v1935
    %v2005 = vunpack.c.l.b16 %v1936
    %v2006 = vunpack.c.l.b16 %v1937
    %v2007 = vunpack.c.l.b16 %v1938
    %v2008 = vunpack.c.l.b16 %v1939
    %v2009 = vunpack.c.l.b16 %v1940
    %v2010 = vunpack.c.l.b16 %v1941
    %v2011 = vunpack.c.l.b16 %v1942
    %v2012 = vunpack.c.l.b16 %v1943
    %v2013 = vunpack.c.l.b16 %v1944
    %v2014 = vunpack.c.l.b16 %v1945
    %v2015 = vunpack.c.l.b16 %v1946
    %v2016 = vunpack.c.l.b16 %v1947
    %v2017 = vunpack.c.l.b16 %v1948
    %v2018 = vunpack.c.l.b16 %v1949
    %v2019 = vunpack.c.l.b16 %v1950
    %v2020 = vunpack.c.l.b16 %v1951
    %v2021 = vunpack.c.l.b16 %v1952
    %v2022 = vpack.c.b16 %v1991, %v1990
    %v2023 = vpack.c.b16 %v1993, %v1992
    %v2024 = vpack.c.b16 %v1995, %v1994
    %v2025 = vpack.c.b16 %v1997, %v1996
    %v2026 = vpack.c.b16 %v1999, %v1998
    %v2027 = vpack.c.b16 %v2001, %v2000
    %v2028 = vpack.c.b16 %v2003, %v2002
    %v2029 = vpack.c.b16 %v2005, %v2004
    %v2030 = vpack.c.b16 %v2007, %v2006
    %v2031 = vpack.c.b16 %v2009, %v2008
    %v2032 = vpack.c.b16 %v2011, %v2010
    %v2033 = vpack.c.b16 %v2013, %v2012
    %v2034 = vpack.c.b16 %v2015, %v2014
    %v2035 = vpack.c.b16 %v2017, %v2016
    %v2036 = vpack.c.b16 %v2019, %v2018
    %v2037 = vpack.c.b16 %v2021, %v2020
    %2054 = vmatprep.subr.bf16.mxu0 0
    %2055 = vmatpush1.bf16.msra.mxu0 %v2029
    %2056 = vmatprep.subr.bf16.mxu0 0
    %2057 = vmatpush1.bf16.msra.mxu0 %v2028
    %2058 = vmatprep.subr.bf16.mxu0 0
    %2059 = vmatpush1.bf16.msra.mxu0 %v2027
    %2060 = vmatprep.subr.bf16.mxu0 0
    %2061 = vmatpush1.bf16.msra.mxu0 %v2026
    %2062 = vmatprep.subr.bf16.mxu0 0
    %2063 = vmatpush1.bf16.msra.mxu0 %v2025
    %2064 = vmatprep.subr.bf16.mxu0 0
    %2065 = vmatpush1.bf16.msra.mxu0 %v2024
    %2066 = vmatprep.subr.bf16.mxu0 0
    %2067 = vmatpush1.bf16.msra.mxu0 %v2023
    %2068 = vmatprep.subr.bf16.mxu0 0
    %2069 = vmatpush1.bf16.msra.mxu0 %v2022
    %2070 = vmatprep.subr.bf16.mxu0 0
    %2071 = vmatpush2.bf16.msra.mxu0 %v2037
    %2072 = vmatprep.subr.bf16.mxu0 0
    %2073 = vmatpush2.bf16.msra.mxu0 %v2036
    %2074 = vmatprep.subr.bf16.mxu0 0
    %2075 = vmatpush2.bf16.msra.mxu0 %v2035
    %2076 = vmatprep.subr.bf16.mxu0 0
    %2077 = vmatpush2.bf16.msra.mxu0 %v2034
    %2078 = vmatprep.subr.bf16.mxu0 0
    %2079 = vmatpush2.bf16.msra.mxu0 %v2033
    %2080 = vmatprep.subr.bf16.mxu0 0
    %2081 = vmatpush2.bf16.msra.mxu0 %v2032
    %2082 = vmatprep.subr.bf16.mxu0 0
    %2083 = vmatpush2.bf16.msra.mxu0 %v2031
    %2084 = vmatprep.subr.bf16.mxu0 0
    %2085 = vmatpush2.bf16.msra.mxu0 %v2030
    %2086 = vmatprep.mubr.bf16.mxu0 %v1919
    %2087 = vmatmul.mubr.bf16.gmra.mxu0 %v1918
    %v2088 = vpop.f32.mrf.mxu0
    %v2089 = vadd.f32 %v1957, %v2088
    %v2090 = vpop.f32.mrf.mxu0
    %v2091 = vpop.f32.mrf.mxu0
    %v2092 = vpop.f32.mrf.mxu0
    %2093 = vdwg.mxu0
    %s2094 = scalar_lea.vmem %s7, 24
    %2095 = vst.msk [vmem:[%s2094] sm:$0xff] %vm549, %v2089
    // Predicated region
    $region34: #{multihead_dueling_q_net.1} parent=1 // pred_check
      _
    $region35: #{multihead_dueling_q_net.1} parent=1 // pred_check_branch
      %2097 = sbr.rel (0) target = $region37
    $region36: #{multihead_dueling_q_net.1} parent=1 // pred_region
      _
    $region37: #{multihead_dueling_q_net.1} parent=1 // pred_fallthru
      _
    // Predicated region
    $region38: #{multihead_dueling_q_net.1} parent=1 // pred_check
      _
    $region39: #{multihead_dueling_q_net.1} parent=1 // pred_check_branch
      %2099 = sbr.rel (0) target = $region41
    $region40: #{multihead_dueling_q_net.1} parent=1 // pred_region
      _
    $region41: #{multihead_dueling_q_net.1} parent=1 // pred_fallthru
      _
    %2100 = vsyncpa [#allocation3], 1

</llo_original>
